<compile_context>
chip_gen: v5e
topology: v5e:2x2
jax: 0.10.0
libtpu: 0.0.40
codegen_flags: <defaults>
</compile_context>

<pallas_src>
import jax
import jax.numpy as jnp
from jax.experimental import pallas as pl
from jax.experimental.pallas import tpu as pltpu

# Logical layer sizes (from the PyTorch module).
D_IN, D_H1, D_H2, D_OUT = 28 * 28, 400, 600, 10
# Lane-padded sizes (multiples of 128).
P_IN, P_H1, P_H2, P_OUT = 896, 512, 640, 128

_NEG_INF = -1e30


# ---------------------------------------------------------------------------
# Kernel: fused 3-layer MLP + masked log_softmax (single VMEM block, no grid)
# ---------------------------------------------------------------------------
def _bnn_mlp_kernel(x_ref, w1_ref, b1_ref, w2_ref, b2_ref, w3_ref, b3_ref, out_ref):
    def linear(a_bf16, w_ref, b_ref):
        # Weights are pre-transposed to (in, out): standard contraction, f32 accumulate.
        y = jax.lax.dot_general(
            a_bf16, w_ref[...],
            dimension_numbers=(((1,), (0,)), ((), ())),
            preferred_element_type=jnp.float32)
        return y + b_ref[...]

    x = x_ref[...]                                                     # (Bp, P_IN) bf16
    h1 = jnp.maximum(linear(x, w1_ref, b1_ref), 0.0).astype(jnp.bfloat16)
    h2 = jnp.maximum(linear(h1, w2_ref, b2_ref), 0.0).astype(jnp.bfloat16)
    logits = linear(h2, w3_ref, b3_ref)                                # (Bp, P_OUT) f32

    # log_softmax over the first D_OUT lanes of the lane-padded output tile.
    lane = jax.lax.broadcasted_iota(jnp.int32, logits.shape, dimension=1)
    logits = jnp.where(lane < D_OUT, logits, _NEG_INF)
    m = jnp.max(logits, axis=-1, keepdims=True)
    shifted = logits - m
    lse = jnp.log(jnp.sum(jnp.exp(shifted), axis=-1, keepdims=True))
    out_ref[...] = (shifted - lse).astype(out_ref.dtype)


# ---------------------------------------------------------------------------
# Host-side parameter prep (run ONCE per parameter set, results are reused)
# ---------------------------------------------------------------------------
def _pad_t_w(w, in_p, out_p):
    """(out, in) f32 -> pre-transposed (in_p, out_p) bf16, zero-padded."""
    w = jnp.asarray(w, jnp.float32).T                       # (in, out)
    w = jnp.pad(w, ((0, in_p - w.shape[0]), (0, out_p - w.shape[1])))
    return w.astype(jnp.bfloat16)


def _pad_b(b, out_p):
    b = jnp.asarray(b, jnp.float32).reshape(1, -1)
    return jnp.pad(b, ((0, 0), (0, out_p - b.shape[1])))


def prepare_params(params):
    """Cache-friendly prep: padded/transposed bf16 mu & sigma weights, f32 biases.

    sigma = softplus(rho) is computed here exactly once; padded entries are 0 so
    sampled padded weights stay exactly 0.
    """
    dims = [(P_IN, P_H1), (P_H1, P_H2), (P_H2, P_OUT)]
    prep = {}
    for i, (in_p, out_p) in enumerate(dims, start=1):
        w_sigma = jax.nn.softplus(jnp.asarray(params[f"w{i}_rho"], jnp.float32))
        b_sigma = jax.nn.softplus(jnp.asarray(params[f"b{i}_rho"], jnp.float32))
        prep[f"w{i}_mu"] = _pad_t_w(params[f"w{i}_mu"], in_p, out_p)
        prep[f"w{i}_sigma"] = _pad_t_w(w_sigma, in_p, out_p)
        prep[f"b{i}_mu"] = _pad_b(params[f"b{i}_mu"], out_p)
        prep[f"b{i}_sigma"] = _pad_b(b_sigma, out_p)
    return jax.tree_util.tree_map(jax.device_put, prep)


def _sample_weights(prep, key):
    """Reparameterized weight/bias draw: mu + sigma * eps (eps ~ N(0,1)), bf16 weights."""
    keys = jax.random.split(key, 6)
    out = []
    for i in range(1, 4):
        wmu, wsig = prep[f"w{i}_mu"], prep[f"w{i}_sigma"]
        bmu, bsig = prep[f"b{i}_mu"], prep[f"b{i}_sigma"]
        eps_w = jax.random.normal(keys[2 * (i - 1)], wmu.shape, dtype=jnp.float32)
        eps_b = jax.random.normal(keys[2 * (i - 1) + 1], bmu.shape, dtype=jnp.float32)
        w = (wmu.astype(jnp.float32) + wsig.astype(jnp.float32) * eps_w).astype(jnp.bfloat16)
        b = bmu + bsig * eps_b
        out += [w, b]
    return tuple(out)


# ---------------------------------------------------------------------------
# Forward wrapper
# ---------------------------------------------------------------------------
def bnn_forward_pallas(x_nchw, prep, *, sample=False, key=None):
    """Forward pass of BayesianNetwork.

    x_nchw: (B, 1, 28, 28) float32
    prep:   output of prepare_params(params) -- cached padded/transposed weights.
    sample: if True, weights = mu + softplus(rho) * eps (reparameterization);
            otherwise weights = mu.
    Returns (B, 10) log-probabilities.
    """
    B = x_nchw.shape[0]
    x = jnp.asarray(x_nchw, jnp.float32).reshape(B, D_IN).astype(jnp.bfloat16)
    Bp = max(8, ((B + 7) // 8) * 8)
    x = jnp.pad(x, ((0, Bp - B), (0, P_IN - D_IN)))

    if sample:
        if key is None:
            raise ValueError("sample=True requires a PRNG key")
        w1, b1, w2, b2, w3, b3 = _sample_weights(prep, key)
    else:
        w1, b1 = prep["w1_mu"], prep["b1_mu"]
        w2, b2 = prep["w2_mu"], prep["b2_mu"]
        w3, b3 = prep["w3_mu"], prep["b3_mu"]

    args = (x, w1, b1, w2, b2, w3, b3)
    vmem = pl.BlockSpec(memory_space=pltpu.MemorySpace.VMEM)
    flops = 2 * Bp * (P_IN * P_H1 + P_H1 * P_H2 + P_H2 * P_OUT)
    bytes_accessed = sum(int(a.size) * a.dtype.itemsize for a in args) + Bp * P_OUT * 4

    out_p = pl.pallas_call(
        _bnn_mlp_kernel,
        out_shape=jax.ShapeDtypeStruct((Bp, P_OUT), jnp.float32),
        in_specs=[vmem] * len(args),
        out_specs=vmem,
        compiler_params=pltpu.CompilerParams(vmem_limit_bytes=32 * 1024 * 1024),
        cost_estimate=pl.CostEstimate(
            flops=flops, transcendentals=Bp * P_OUT, bytes_accessed=bytes_accessed),
    )(*args)

    return out_p[:B, :D_OUT]


# ---------------------------------------------------------------------------
# Init + references (test scaffolding)
# ---------------------------------------------------------------------------
def init_params(key):
    """Deterministic init matching BayesianLinear.__init__ shapes / ranges."""
    dims = [(D_IN, D_H1), (D_H1, D_H2), (D_H2, D_OUT)]
    params = {}
    keys = jax.random.split(key, 4 * len(dims))
    for i, (fin, fout) in enumerate(dims, start=1):
        k_wm, k_wr, k_bm, k_br = keys[4 * (i - 1):4 * i]
        params[f"w{i}_mu"] = jax.random.uniform(
            k_wm, (fout, fin), minval=-0.2, maxval=0.2, dtype=jnp.float32)
        params[f"w{i}_rho"] = jax.random.uniform(
            k_wr, (fout, fin), minval=-5.0, maxval=-4.0, dtype=jnp.float32)
        params[f"b{i}_mu"] = jax.random.uniform(
            k_bm, (fout,), minval=-0.2, maxval=0.2, dtype=jnp.float32)
        params[f"b{i}_rho"] = jax.random.uniform(
            k_br, (fout,), minval=-5.0, maxval=-4.0, dtype=jnp.float32)
    return params


def _reference_from_args(x_nchw, w1, b1, w2, b2, w3, b3):
    """Pure-JAX reference over the *padded kernel args*, emulating the kernel's
    bf16 activation casts (so eval and sample paths can both be checked tightly)."""
    B = x_nchw.shape[0]
    x = jnp.asarray(x_nchw, jnp.float32).reshape(B, D_IN)
    x = x.astype(jnp.bfloat16).astype(jnp.float32)

    def lin(a, w, b, din, dout):
        return a @ w[:din, :dout].astype(jnp.float32) + b[0, :dout]

    h1 = jax.nn.relu(lin(x, w1, b1, D_IN, D_H1)).astype(jnp.bfloat16).astype(jnp.float32)
    h2 = jax.nn.relu(lin(h1, w2, b2, D_H1, D_H2)).astype(jnp.bfloat16).astype(jnp.float32)
    logits = lin(h2, w3, b3, D_H2, D_OUT)
    return jax.nn.log_softmax(logits, axis=1)


def _reference_forward_f32(x_nchw, params):
    """Exact f32 semantics of the PyTorch module (eval path), for a loose sanity check."""
    x = jnp.asarray(x_nchw, jnp.float32).reshape(-1, D_IN)
    h = jax.nn.relu(x @ jnp.asarray(params["w1_mu"]).T + params["b1_mu"])
    h = jax.nn.relu(h @ jnp.asarray(params["w2_mu"]).T + params["b2_mu"])
    logits = h @ jnp.asarray(params["w3_mu"]).T + params["b3_mu"]
    return jax.nn.log_softmax(logits, axis=1)


if __name__ == "__main__":
    key = jax.random.PRNGKey(0)
    k_params, k_x, k_sample = jax.random.split(key, 3)

    params = init_params(k_params)
    prep = prepare_params(params)        # cached once, reused by every forward call

    B = 8  # small batch (module uses 100; any batch works since x.view(-1, 784))
    x = jax.random.uniform(k_x, (B, 1, 28, 28), dtype=jnp.float32)

    # ---- Deterministic (eval) path: weights = mu ----
    out = jax.block_until_ready(bnn_forward_pallas(x, prep, sample=False))
    assert out.shape == (B, 10)

    ref_eval = _reference_from_args(x, prep["w1_mu"], prep["b1_mu"],
                                    prep["w2_mu"], prep["b2_mu"],
                                    prep["w3_mu"], prep["b3_mu"])
    assert jnp.allclose(out, ref_eval, atol=2e-2, rtol=2e-2), \
        float(jnp.max(jnp.abs(out - ref_eval)))
    # Loose check against exact f32 module semantics (bf16 weights/activations differ slightly).
    ref_f32 = _reference_forward_f32(x, params)
    assert jnp.allclose(out, ref_f32, atol=0.5, rtol=0.1)
    # log_softmax rows sum (in prob space) to 1 over the 10 classes.
    assert jnp.allclose(jnp.sum(jnp.exp(out), axis=1), 1.0, atol=1e-3)

    # ---- Sampled (reparameterized) path: W = mu + softplus(rho) * eps ----
    out_s = jax.block_until_ready(bnn_forward_pallas(x, prep, sample=True, key=k_sample))
    assert out_s.shape == (B, 10)
    assert bool(jnp.all(jnp.isfinite(out_s)))
    assert jnp.allclose(jnp.sum(jnp.exp(out_s), axis=1), 1.0, atol=1e-3)
    # Tight check: recreate the same sampled weights (deterministic in the key) and
    # run the bf16-emulating reference on them.
    sw = _sample_weights(prep, k_sample)
    ref_sample = _reference_from_args(x, *sw)
    assert jnp.allclose(out_s, ref_sample, atol=2e-2, rtol=2e-2), \
        float(jnp.max(jnp.abs(out_s - ref_sample)))

    print("KERNEL_OK")
</pallas_src>

<mosaic_0001>
module attributes {stable_mosaic.version = 11 : i64} {
  func.func @_bnn_mlp_kernel(%arg0: memref<8x896xbf16, #tpu.memory_space<vmem>>, %arg1: memref<896x512xbf16, #tpu.memory_space<vmem>>, %arg2: memref<1x512xf32, #tpu.memory_space<vmem>>, %arg3: memref<512x640xbf16, #tpu.memory_space<vmem>>, %arg4: memref<1x640xf32, #tpu.memory_space<vmem>>, %arg5: memref<640x128xbf16, #tpu.memory_space<vmem>>, %arg6: memref<1x128xf32, #tpu.memory_space<vmem>>, %arg7: memref<8x128xf32, #tpu.memory_space<vmem>>) attributes {dimension_semantics = [], scalar_prefetch = 0 : i64, scratch_operands = 0 : i64, tpu.core_type = #tpu.core_type<tc>} {
    %c0 = arith.constant 0 : index
    %c0_0 = arith.constant 0 : index
    %0 = vector.load %arg0[%c0, %c0_0] : memref<8x896xbf16, #tpu.memory_space<vmem>>, vector<8x896xbf16>
    %c0_1 = arith.constant 0 : index
    %c0_2 = arith.constant 0 : index
    %1 = vector.load %arg1[%c0_1, %c0_2] : memref<896x512xbf16, #tpu.memory_space<vmem>>, vector<896x512xbf16>
    %cst = arith.constant dense<0.000000e+00> : vector<8x512xf32>
    %2 = tpu.matmul %0, %1, %cst {dimension_numbers = #tpu.dot_dimension_numbers<[1], [0], [0], [1], [0, 0, 1, 1], [], []>} : vector<8x896xbf16>, vector<896x512xbf16>, vector<8x512xf32> -> vector<8x512xf32>
    %c0_3 = arith.constant 0 : index
    %c0_4 = arith.constant 0 : index
    %3 = vector.load %arg2[%c0_3, %c0_4] : memref<1x512xf32, #tpu.memory_space<vmem>>, vector<1x512xf32>
    %4 = vector.broadcast %3 : vector<1x512xf32> to vector<8x512xf32>
    %5 = arith.addf %2, %4 : vector<8x512xf32>
    %cst_5 = arith.constant 0.000000e+00 : f32
    %6 = vector.broadcast %cst_5 : f32 to vector<8x512xf32>
    %7 = arith.maximumf %5, %6 : vector<8x512xf32>
    %8 = arith.truncf %7 : vector<8x512xf32> to vector<8x512xbf16>
    %c0_6 = arith.constant 0 : index
    %c0_7 = arith.constant 0 : index
    %9 = vector.load %arg3[%c0_6, %c0_7] : memref<512x640xbf16, #tpu.memory_space<vmem>>, vector<512x640xbf16>
    %cst_8 = arith.constant dense<0.000000e+00> : vector<8x640xf32>
    %10 = tpu.matmul %8, %9, %cst_8 {dimension_numbers = #tpu.dot_dimension_numbers<[1], [0], [0], [1], [0, 0, 1, 1], [], []>} : vector<8x512xbf16>, vector<512x640xbf16>, vector<8x640xf32> -> vector<8x640xf32>
    %c0_9 = arith.constant 0 : index
    %c0_10 = arith.constant 0 : index
    %11 = vector.load %arg4[%c0_9, %c0_10] : memref<1x640xf32, #tpu.memory_space<vmem>>, vector<1x640xf32>
    %12 = vector.broadcast %11 : vector<1x640xf32> to vector<8x640xf32>
    %13 = arith.addf %10, %12 : vector<8x640xf32>
    %cst_11 = arith.constant 0.000000e+00 : f32
    %14 = vector.broadcast %cst_11 : f32 to vector<8x640xf32>
    %15 = arith.maximumf %13, %14 : vector<8x640xf32>
    %16 = arith.truncf %15 : vector<8x640xf32> to vector<8x640xbf16>
    %c0_12 = arith.constant 0 : index
    %c0_13 = arith.constant 0 : index
    %17 = vector.load %arg5[%c0_12, %c0_13] : memref<640x128xbf16, #tpu.memory_space<vmem>>, vector<640x128xbf16>
    %cst_14 = arith.constant dense<0.000000e+00> : vector<8x128xf32>
    %18 = tpu.matmul %16, %17, %cst_14 {dimension_numbers = #tpu.dot_dimension_numbers<[1], [0], [0], [1], [0, 0, 1, 1], [], []>} : vector<8x640xbf16>, vector<640x128xbf16>, vector<8x128xf32> -> vector<8x128xf32>
    %c0_15 = arith.constant 0 : index
    %c0_16 = arith.constant 0 : index
    %19 = vector.load %arg6[%c0_15, %c0_16] : memref<1x128xf32, #tpu.memory_space<vmem>>, vector<1x128xf32>
    %20 = vector.broadcast %19 : vector<1x128xf32> to vector<8x128xf32>
    %21 = arith.addf %18, %20 : vector<8x128xf32>
    %22 = tpu.iota {dimensions = array<i32: 1>} : vector<8x128xi32>
    %c10_i32 = arith.constant 10 : i32
    %23 = vector.broadcast %c10_i32 : i32 to vector<8x128xi32>
    %24 = arith.cmpi slt, %22, %23 : vector<8x128xi32>
    %cst_17 = arith.constant -1.000000e+30 : f32
    %25 = vector.broadcast %cst_17 : f32 to vector<8x128xf32>
    %26 = arith.select %24, %21, %25 : vector<8x128xi1>, vector<8x128xf32>
    %cst_18 = arith.constant dense<0xFF800000> : vector<8xf32>
    %27 = vector.multi_reduction <maximumf>, %26, %cst_18 [1] : vector<8x128xf32> to vector<8xf32>
    %28 = vector.shape_cast %27 : vector<8xf32> to vector<8x1xf32>
    %29 = vector.broadcast %28 : vector<8x1xf32> to vector<8x128xf32>
    %30 = arith.subf %26, %29 : vector<8x128xf32>
    %31 = math.exp %30 : vector<8x128xf32>
    %cst_19 = arith.constant dense<0.000000e+00> : vector<8xf32>
    %32 = vector.multi_reduction <add>, %31, %cst_19 [1] : vector<8x128xf32> to vector<8xf32>
    %33 = vector.shape_cast %32 : vector<8xf32> to vector<8x1xf32>
    %34 = math.log %33 : vector<8x1xf32>
    %35 = vector.broadcast %34 : vector<8x1xf32> to vector<8x128xf32>
    %36 = arith.subf %30, %35 : vector<8x128xf32>
    %c0_20 = arith.constant 0 : index
    %c0_21 = arith.constant 0 : index
    %37 = vector.load %arg7[%c0_20, %c0_21] : memref<8x128xf32, #tpu.memory_space<vmem>>, vector<8x128xf32>
    tpu.vector_store %arg7[%c0_20, %c0_21], %36 {strides = array<i32>} : memref<8x128xf32, #tpu.memory_space<vmem>>, vector<8x128xf32>,
    return
  }
}

</mosaic_0001>

<llo_original>
// kernel: tpu_custom_call.1
$region0: #{tpu_custom_call.1}
  #allocation0 [shape = 'u32[]', space=smem, size = 0x4, offset = 0x4, fixed_abs, tag = 'smem constant byte address 0x4 - core index']
  #allocation1 [shape = 'u32[72,128]{1,0:T(1,128)}', space=vmem, size = 0x9000, scoped, tag = 'internal scratch']
  %s0 = inlined_call_operand.hbm [shape: bf16[8,896], index: 0, kind: input, shape index: {}]
  %s1 = inlined_call_operand.hbm [shape: bf16[896,512], index: 1, kind: input, shape index: {}]
  %s2 = inlined_call_operand.hbm [shape: f32[1,512], index: 2, kind: input, shape index: {}]
  %s3 = inlined_call_operand.hbm [shape: bf16[512,640], index: 3, kind: input, shape index: {}]
  %s4 = inlined_call_operand.hbm [shape: f32[1,640], index: 4, kind: input, shape index: {}]
  %s5 = inlined_call_operand.hbm [shape: bf16[640,128], index: 5, kind: input, shape index: {}]
  %s6 = inlined_call_operand.vmem [shape: f32[1,128], index: 6, kind: input, shape index: {}]
  %s7 = inlined_call_operand.hbm [shape: f32[8,128], index: 7, kind: output, shape index: {}]
  %s8 = sld [smem:[#allocation0]]
  $region62: #{tpu_custom_call.1} parent=0
    _
  %s10 = ssub.s32 1, %s8
  %s11 = scalar_select 0, %s10, %s8
  $region1: #{tpu_custom_call.1} parent=0
    #allocation2 [shape = 'u8[14336]{0}', space=vmem, size = 0x3800, scoped, tag = 'input window, operand 0, single buffered']
    #allocation3 [shape = 's32[1]{0}', space=sflag, size = 0x4, scoped, tag = 'scoped memory for tpu_custom_call.1']
    #allocation4 [shape = 's32[1]{0}', space=sflag, size = 0x4, scoped, tag = 'scoped memory for tpu_custom_call.1']
    #allocation5 [shape = 'u8[917504]{0}', space=vmem, size = 0xe0000, scoped, tag = 'input window, operand 1, single buffered']
    #allocation6 [shape = 's32[1]{0}', space=sflag, size = 0x4, scoped, tag = 'scoped memory for tpu_custom_call.1']
    #allocation7 [shape = 'u8[2048]{0}', space=vmem, size = 0x800, scoped, tag = 'input window, operand 2, single buffered']
    #allocation8 [shape = 'u8[655360]{0}', space=vmem, size = 0xa0000, scoped, tag = 'input window, operand 3, single buffered']
    #allocation9 [shape = 's32[1]{0}', space=sflag, size = 0x4, scoped, tag = 'scoped memory for tpu_custom_call.1']
    #allocation10 [shape = 'u8[2560]{0}', space=vmem, size = 0xc00, scoped, tag = 'input window, operand 4, single buffered']
    #allocation11 [shape = 'u8[163840]{0}', space=vmem, size = 0x28000, scoped, tag = 'input window, operand 5, single buffered']
    #allocation12 [shape = 's32[1]{0}', space=sflag, size = 0x4, scoped, tag = 'scoped memory for tpu_custom_call.1']
    #allocation13 [shape = 'u8[4096]{0}', space=vmem, size = 0x1000, scoped, tag = 'output window, operand 0, single buffered']
    %12 = vsyncpa [#allocation3], 0
    %13 = vsyncpa [#allocation6], 0
    %14 = vsyncpa [#allocation9], 0
    %15 = vsyncpa [#allocation12], 0
    %16 = vsyncpa [#allocation4], 0
    // Predicated region
    $region2: #{tpu_custom_call.1} parent=1 // pred_check
      _
    $region3: #{tpu_custom_call.1} parent=1 // pred_check_branch
      %18 = sbr.rel (0) target = $region5
    $region4: #{tpu_custom_call.1} parent=1 // pred_region
      %20 = vsyncadd [#allocation3], 0
      %s22 = sshll.u32 %s0, 4
      %s23 = int_to_ptr.hbm [resolvable:$true] %s22
      %s24 = sshll.u32 [#allocation2], 4
      %s25 = int_to_ptr.vmem [resolvable:$true] %s24
      %27 = dma.hbm_to_vmem [thread:$0]  %s23, 448, %s25, [#allocation3]
    $region5: #{tpu_custom_call.1} parent=1 // pred_fallthru
      _
    // Predicated region
    $region6: #{tpu_custom_call.1} parent=1 // pred_check
      _
    $region7: #{tpu_custom_call.1} parent=1 // pred_check_branch
      %29 = sbr.rel (0) target = $region9
    $region8: #{tpu_custom_call.1} parent=1 // pred_region
      %31 = vsyncadd [#allocation6], 0
      %s32 = sshll.u32 %s1, 4
      %s33 = int_to_ptr.hbm [resolvable:$true] %s32
      %s34 = sshll.u32 [#allocation5], 4
      %s35 = int_to_ptr.vmem [resolvable:$true] %s34
      %40 = dma.hbm_to_vmem [thread:$0]  %s33, 28672, %s35, [#allocation6], 256, 256, 16
    $region9: #{tpu_custom_call.1} parent=1 // pred_fallthru
      _
    // Predicated region
    $region10: #{tpu_custom_call.1} parent=1 // pred_check
      _
    $region11: #{tpu_custom_call.1} parent=1 // pred_check_branch
      %42 = sbr.rel (0) target = $region13
    $region12: #{tpu_custom_call.1} parent=1 // pred_region
      %44 = vsyncadd [#allocation6], 0
      %s46 = sshll.u32 %s2, 4
      %s47 = int_to_ptr.hbm [resolvable:$true] %s46
      %s48 = sshll.u32 [#allocation7], 4
      %s49 = int_to_ptr.vmem [resolvable:$true] %s48
      %51 = dma.hbm_to_vmem [thread:$0]  %s47, 64, %s49, [#allocation6]
    $region13: #{tpu_custom_call.1} parent=1 // pred_fallthru
      _
    // Predicated region
    $region14: #{tpu_custom_call.1} parent=1 // pred_check
      _
    $region15: #{tpu_custom_call.1} parent=1 // pred_check_branch
      %53 = sbr.rel (0) target = $region17
    $region16: #{tpu_custom_call.1} parent=1 // pred_region
      %55 = vsyncadd [#allocation9], 0
      %s56 = sshll.u32 %s3, 4
      %s57 = int_to_ptr.hbm [resolvable:$true] %s56
      %s58 = sshll.u32 [#allocation8], 4
      %s59 = int_to_ptr.vmem [resolvable:$true] %s58
      %64 = dma.hbm_to_vmem [thread:$0]  %s57, 20480, %s59, [#allocation9], 320, 320, 20
    $region17: #{tpu_custom_call.1} parent=1 // pred_fallthru
      _
    // Predicated region
    $region18: #{tpu_custom_call.1} parent=1 // pred_check
      _
    $region19: #{tpu_custom_call.1} parent=1 // pred_check_branch
      %66 = sbr.rel (0) target = $region21
    $region20: #{tpu_custom_call.1} parent=1 // pred_region
      %68 = vsyncadd [#allocation9], 0
      %s70 = sshll.u32 %s4, 4
      %s71 = int_to_ptr.hbm [resolvable:$true] %s70
      %s72 = sshll.u32 [#allocation10], 4
      %s73 = int_to_ptr.vmem [resolvable:$true] %s72
      %75 = dma.hbm_to_vmem [thread:$0]  %s71, 80, %s73, [#allocation9]
    $region21: #{tpu_custom_call.1} parent=1 // pred_fallthru
      _
    // Predicated region
    $region22: #{tpu_custom_call.1} parent=1 // pred_check
      _
    $region23: #{tpu_custom_call.1} parent=1 // pred_check_branch
      %77 = sbr.rel (0) target = $region25
    $region24: #{tpu_custom_call.1} parent=1 // pred_region
      %79 = vsyncadd [#allocation12], 0
      %s80 = sshll.u32 %s5, 4
      %s81 = int_to_ptr.hbm [resolvable:$true] %s80
      %s82 = sshll.u32 [#allocation11], 4
      %s83 = int_to_ptr.vmem [resolvable:$true] %s82
      %88 = dma.hbm_to_vmem [thread:$0]  %s81, 5120, %s83, [#allocation12], 64, 64, 4
    $region25: #{tpu_custom_call.1} parent=1 // pred_fallthru
      _
    // Predicated region
    $region26: #{tpu_custom_call.1} parent=1 // pred_check
      _
    $region27: #{tpu_custom_call.1} parent=1 // pred_check_branch
      %90 = sbr.rel (0) target = $region29
    $region28: #{tpu_custom_call.1} parent=1 // pred_region
      _
    $region29: #{tpu_custom_call.1} parent=1 // pred_fallthru
      _
    // Predicated region
    $region30: #{tpu_custom_call.1} parent=1 // pred_check
      _
    $region31: #{tpu_custom_call.1} parent=1 // pred_check_branch
      %92 = sbr.rel (0) target = $region33
    $region32: #{tpu_custom_call.1} parent=1 // pred_region
      %94 = dma.done [#allocation3], 448
    $region33: #{tpu_custom_call.1} parent=1 // pred_fallthru
      _
    // Predicated region
    $region34: #{tpu_custom_call.1} parent=1 // pred_check
      _
    $region35: #{tpu_custom_call.1} parent=1 // pred_check_branch
      %96 = sbr.rel (0) target = $region37
    $region36: #{tpu_custom_call.1} parent=1 // pred_region
      %98 = dma.done [#allocation6], 28672
    $region37: #{tpu_custom_call.1} parent=1 // pred_fallthru
      _
    // Predicated region
    $region38: #{tpu_custom_call.1} parent=1 // pred_check
      _
    $region39: #{tpu_custom_call.1} parent=1 // pred_check_branch
      %100 = sbr.rel (0) target = $region41
    $region40: #{tpu_custom_call.1} parent=1 // pred_region
      %102 = dma.done [#allocation6], 64
    $region41: #{tpu_custom_call.1} parent=1 // pred_fallthru
      _
    // Predicated region
    $region42: #{tpu_custom_call.1} parent=1 // pred_check
      _
    $region43: #{tpu_custom_call.1} parent=1 // pred_check_branch
      %104 = sbr.rel (0) target = $region45
    $region44: #{tpu_custom_call.1} parent=1 // pred_region
      %106 = dma.done [#allocation9], 20480
    $region45: #{tpu_custom_call.1} parent=1 // pred_fallthru
      _
    // Predicated region
    $region46: #{tpu_custom_call.1} parent=1 // pred_check
      _
    $region47: #{tpu_custom_call.1} parent=1 // pred_check_branch
      %108 = sbr.rel (0) target = $region49
    $region48: #{tpu_custom_call.1} parent=1 // pred_region
      %110 = dma.done [#allocation9], 80
    $region49: #{tpu_custom_call.1} parent=1 // pred_fallthru
      _
    // Predicated region
    $region50: #{tpu_custom_call.1} parent=1 // pred_check
      _
    $region51: #{tpu_custom_call.1} parent=1 // pred_check_branch
      %112 = sbr.rel (0) target = $region53
    $region52: #{tpu_custom_call.1} parent=1 // pred_region
      %114 = dma.done [#allocation12], 5120
    $region53: #{tpu_custom_call.1} parent=1 // pred_fallthru
      _
    %v115 = vld [vmem:[#allocation2] sm:$0xff]
    %v116 = vld [vmem:[#allocation2 + $0x8] sm:$0xff]
    %v117 = vld [vmem:[#allocation2 + $0x10] sm:$0xff]
    %v118 = vld [vmem:[#allocation2 + $0x18] sm:$0xf]
    %v119 = vld [vmem:[#allocation5] sm:$0xff]
    %v120 = vld [vmem:[#allocation5 + $0x8] sm:$0xff]
    %v121 = vld [vmem:[#allocation5 + $0x10] sm:$0xff]
    %v122 = vld [vmem:[#allocation5 + $0x18] sm:$0xff]
    %v123 = vld [vmem:[#allocation5 + $0x20] sm:$0xff]
    %v124 = vld [vmem:[#allocation5 + $0x28] sm:$0xff]
    %v125 = vld [vmem:[#allocation5 + $0x30] sm:$0xff]
    %v126 = vld [vmem:[#allocation5 + $0x38] sm:$0xff]
    %v127 = vld [vmem:[#allocation5 + $0x40] sm:$0xff]
    %v128 = vld [vmem:[#allocation5 + $0x48] sm:$0xff]
    %v129 = vld [vmem:[#allocation5 + $0x50] sm:$0xff]
    %v130 = vld [vmem:[#allocation5 + $0x58] sm:$0xff]
    %v131 = vld [vmem:[#allocation5 + $0x60] sm:$0xff]
    %v132 = vld [vmem:[#allocation5 + $0x68] sm:$0xff]
    %v133 = vld [vmem:[#allocation5 + $0x70] sm:$0xff]
    %v134 = vld [vmem:[#allocation5 + $0x78] sm:$0xff]
    %v135 = vld [vmem:[#allocation5 + $0x80] sm:$0xff]
    %v136 = vld [vmem:[#allocation5 + $0x88] sm:$0xff]
    %v137 = vld [vmem:[#allocation5 + $0x90] sm:$0xff]
    %v138 = vld [vmem:[#allocation5 + $0x98] sm:$0xff]
    %v139 = vld [vmem:[#allocation5 + $0xa0] sm:$0xff]
    %v140 = vld [vmem:[#allocation5 + $0xa8] sm:$0xff]
    %v141 = vld [vmem:[#allocation5 + $0xb0] sm:$0xff]
    %v142 = vld [vmem:[#allocation5 + $0xb8] sm:$0xff]
    %v143 = vld [vmem:[#allocation5 + $0xc0] sm:$0xff]
    %v144 = vld [vmem:[#allocation5 + $0xc8] sm:$0xff]
    %v145 = vld [vmem:[#allocation5 + $0xd0] sm:$0xff]
    %v146 = vld [vmem:[#allocation5 + $0xd8] sm:$0xff]
    %v147 = vld [vmem:[#allocation5 + $0xe0] sm:$0xff]
    %v148 = vld [vmem:[#allocation5 + $0xe8] sm:$0xff]
    %v149 = vld [vmem:[#allocation5 + $0xf0] sm:$0xff]
    %v150 = vld [vmem:[#allocation5 + $0xf8] sm:$0xff]
    %v151 = vld [vmem:[#allocation5 + $0x100] sm:$0xff]
    %v152 = vld [vmem:[#allocation5 + $0x108] sm:$0xff]
    %v153 = vld [vmem:[#allocation5 + $0x110] sm:$0xff]
    %v154 = vld [vmem:[#allocation5 + $0x118] sm:$0xff]
    %v155 = vld [vmem:[#allocation5 + $0x120] sm:$0xff]
    %v156 = vld [vmem:[#allocation5 + $0x128] sm:$0xff]
    %v157 = vld [vmem:[#allocation5 + $0x130] sm:$0xff]
    %v158 = vld [vmem:[#allocation5 + $0x138] sm:$0xff]
    %v159 = vld [vmem:[#allocation5 + $0x140] sm:$0xff]
    %v160 = vld [vmem:[#allocation5 + $0x148] sm:$0xff]
    %v161 = vld [vmem:[#allocation5 + $0x150] sm:$0xff]
    %v162 = vld [vmem:[#allocation5 + $0x158] sm:$0xff]
    %v163 = vld [vmem:[#allocation5 + $0x160] sm:$0xff]
    %v164 = vld [vmem:[#allocation5 + $0x168] sm:$0xff]
    %v165 = vld [vmem:[#allocation5 + $0x170] sm:$0xff]
    %v166 = vld [vmem:[#allocation5 + $0x178] sm:$0xff]
    %v167 = vld [vmem:[#allocation5 + $0x180] sm:$0xff]
    %v168 = vld [vmem:[#allocation5 + $0x188] sm:$0xff]
    %v169 = vld [vmem:[#allocation5 + $0x190] sm:$0xff]
    %v170 = vld [vmem:[#allocation5 + $0x198] sm:$0xff]
    %v171 = vld [vmem:[#allocation5 + $0x1a0] sm:$0xff]
    %v172 = vld [vmem:[#allocation5 + $0x1a8] sm:$0xff]
    %v173 = vld [vmem:[#allocation5 + $0x1b0] sm:$0xff]
    %v174 = vld [vmem:[#allocation5 + $0x1b8] sm:$0xff]
    %v175 = vld [vmem:[#allocation5 + $0x1c0] sm:$0xff]
    %v176 = vld [vmem:[#allocation5 + $0x1c8] sm:$0xff]
    %v177 = vld [vmem:[#allocation5 + $0x1d0] sm:$0xff]
    %v178 = vld [vmem:[#allocation5 + $0x1d8] sm:$0xff]
    %v179 = vld [vmem:[#allocation5 + $0x1e0] sm:$0xff]
    %v180 = vld [vmem:[#allocation5 + $0x1e8] sm:$0xff]
    %v181 = vld [vmem:[#allocation5 + $0x1f0] sm:$0xff]
    %v182 = vld [vmem:[#allocation5 + $0x1f8] sm:$0xff]
    %v183 = vld [vmem:[#allocation5 + $0x200] sm:$0xff]
    %v184 = vld [vmem:[#allocation5 + $0x208] sm:$0xff]
    %v185 = vld [vmem:[#allocation5 + $0x210] sm:$0xff]
    %v186 = vld [vmem:[#allocation5 + $0x218] sm:$0xff]
    %v187 = vld [vmem:[#allocation5 + $0x220] sm:$0xff]
    %v188 = vld [vmem:[#allocation5 + $0x228] sm:$0xff]
    %v189 = vld [vmem:[#allocation5 + $0x230] sm:$0xff]
    %v190 = vld [vmem:[#allocation5 + $0x238] sm:$0xff]
    %v191 = vld [vmem:[#allocation5 + $0x240] sm:$0xff]
    %v192 = vld [vmem:[#allocation5 + $0x248] sm:$0xff]
    %v193 = vld [vmem:[#allocation5 + $0x250] sm:$0xff]
    %v194 = vld [vmem:[#allocation5 + $0x258] sm:$0xff]
    %v195 = vld [vmem:[#allocation5 + $0x260] sm:$0xff]
    %v196 = vld [vmem:[#allocation5 + $0x268] sm:$0xff]
    %v197 = vld [vmem:[#allocation5 + $0x270] sm:$0xff]
    %v198 = vld [vmem:[#allocation5 + $0x278] sm:$0xff]
    %v199 = vld [vmem:[#allocation5 + $0x280] sm:$0xff]
    %v200 = vld [vmem:[#allocation5 + $0x288] sm:$0xff]
    %v201 = vld [vmem:[#allocation5 + $0x290] sm:$0xff]
    %v202 = vld [vmem:[#allocation5 + $0x298] sm:$0xff]
    %v203 = vld [vmem:[#allocation5 + $0x2a0] sm:$0xff]
    %v204 = vld [vmem:[#allocation5 + $0x2a8] sm:$0xff]
    %v205 = vld [vmem:[#allocation5 + $0x2b0] sm:$0xff]
    %v206 = vld [vmem:[#allocation5 + $0x2b8] sm:$0xff]
    %v207 = vld [vmem:[#allocation5 + $0x2c0] sm:$0xff]
    %v208 = vld [vmem:[#allocation5 + $0x2c8] sm:$0xff]
    %v209 = vld [vmem:[#allocation5 + $0x2d0] sm:$0xff]
    %v210 = vld [vmem:[#allocation5 + $0x2d8] sm:$0xff]
    %v211 = vld [vmem:[#allocation5 + $0x2e0] sm:$0xff]
    %v212 = vld [vmem:[#allocation5 + $0x2e8] sm:$0xff]
    %v213 = vld [vmem:[#allocation5 + $0x2f0] sm:$0xff]
    %v214 = vld [vmem:[#allocation5 + $0x2f8] sm:$0xff]
    %v215 = vld [vmem:[#allocation5 + $0x300] sm:$0xff]
    %v216 = vld [vmem:[#allocation5 + $0x308] sm:$0xff]
    %v217 = vld [vmem:[#allocation5 + $0x310] sm:$0xff]
    %v218 = vld [vmem:[#allocation5 + $0x318] sm:$0xff]
    %v219 = vld [vmem:[#allocation5 + $0x320] sm:$0xff]
    %v220 = vld [vmem:[#allocation5 + $0x328] sm:$0xff]
    %v221 = vld [vmem:[#allocation5 + $0x330] sm:$0xff]
    %v222 = vld [vmem:[#allocation5 + $0x338] sm:$0xff]
    %v223 = vld [vmem:[#allocation5 + $0x340] sm:$0xff]
    %v224 = vld [vmem:[#allocation5 + $0x348] sm:$0xff]
    %v225 = vld [vmem:[#allocation5 + $0x350] sm:$0xff]
    %v226 = vld [vmem:[#allocation5 + $0x358] sm:$0xff]
    %v227 = vld [vmem:[#allocation5 + $0x360] sm:$0xff]
    %v228 = vld [vmem:[#allocation5 + $0x368] sm:$0xff]
    %v229 = vld [vmem:[#allocation5 + $0x370] sm:$0xff]
    %v230 = vld [vmem:[#allocation5 + $0x378] sm:$0xff]
    %v231 = vld [vmem:[#allocation5 + $0x380] sm:$0xff]
    %v232 = vld [vmem:[#allocation5 + $0x388] sm:$0xff]
    %v233 = vld [vmem:[#allocation5 + $0x390] sm:$0xff]
    %v234 = vld [vmem:[#allocation5 + $0x398] sm:$0xff]
    %v235 = vld [vmem:[#allocation5 + $0x3a0] sm:$0xff]
    %v236 = vld [vmem:[#allocation5 + $0x3a8] sm:$0xff]
    %v237 = vld [vmem:[#allocation5 + $0x3b0] sm:$0xff]
    %v238 = vld [vmem:[#allocation5 + $0x3b8] sm:$0xff]
    %v239 = vld [vmem:[#allocation5 + $0x3c0] sm:$0xff]
    %v240 = vld [vmem:[#allocation5 + $0x3c8] sm:$0xff]
    %v241 = vld [vmem:[#allocation5 + $0x3d0] sm:$0xff]
    %v242 = vld [vmem:[#allocation5 + $0x3d8] sm:$0xff]
    %v243 = vld [vmem:[#allocation5 + $0x3e0] sm:$0xff]
    %v244 = vld [vmem:[#allocation5 + $0x3e8] sm:$0xff]
    %v245 = vld [vmem:[#allocation5 + $0x3f0] sm:$0xff]
    %v246 = vld [vmem:[#allocation5 + $0x3f8] sm:$0xff]
    %v247 = vld [vmem:[#allocation5 + $0x400] sm:$0xff]
    %v248 = vld [vmem:[#allocation5 + $0x408] sm:$0xff]
    %v249 = vld [vmem:[#allocation5 + $0x410] sm:$0xff]
    %v250 = vld [vmem:[#allocation5 + $0x418] sm:$0xff]
    %v251 = vld [vmem:[#allocation5 + $0x420] sm:$0xff]
    %v252 = vld [vmem:[#allocation5 + $0x428] sm:$0xff]
    %v253 = vld [vmem:[#allocation5 + $0x430] sm:$0xff]
    %v254 = vld [vmem:[#allocation5 + $0x438] sm:$0xff]
    %v255 = vld [vmem:[#allocation5 + $0x440] sm:$0xff]
    %v256 = vld [vmem:[#allocation5 + $0x448] sm:$0xff]
    %v257 = vld [vmem:[#allocation5 + $0x450] sm:$0xff]
    %v258 = vld [vmem:[#allocation5 + $0x458] sm:$0xff]
    %v259 = vld [vmem:[#allocation5 + $0x460] sm:$0xff]
    %v260 = vld [vmem:[#allocation5 + $0x468] sm:$0xff]
    %v261 = vld [vmem:[#allocation5 + $0x470] sm:$0xff]
    %v262 = vld [vmem:[#allocation5 + $0x478] sm:$0xff]
    %v263 = vld [vmem:[#allocation5 + $0x480] sm:$0xff]
    %v264 = vld [vmem:[#allocation5 + $0x488] sm:$0xff]
    %v265 = vld [vmem:[#allocation5 + $0x490] sm:$0xff]
    %v266 = vld [vmem:[#allocation5 + $0x498] sm:$0xff]
    %v267 = vld [vmem:[#allocation5 + $0x4a0] sm:$0xff]
    %v268 = vld [vmem:[#allocation5 + $0x4a8] sm:$0xff]
    %v269 = vld [vmem:[#allocation5 + $0x4b0] sm:$0xff]
    %v270 = vld [vmem:[#allocation5 + $0x4b8] sm:$0xff]
    %v271 = vld [vmem:[#allocation5 + $0x4c0] sm:$0xff]
    %v272 = vld [vmem:[#allocation5 + $0x4c8] sm:$0xff]
    %v273 = vld [vmem:[#allocation5 + $0x4d0] sm:$0xff]
    %v274 = vld [vmem:[#allocation5 + $0x4d8] sm:$0xff]
    %v275 = vld [vmem:[#allocation5 + $0x4e0] sm:$0xff]
    %v276 = vld [vmem:[#allocation5 + $0x4e8] sm:$0xff]
    %v277 = vld [vmem:[#allocation5 + $0x4f0] sm:$0xff]
    %v278 = vld [vmem:[#allocation5 + $0x4f8] sm:$0xff]
    %v279 = vld [vmem:[#allocation5 + $0x500] sm:$0xff]
    %v280 = vld [vmem:[#allocation5 + $0x508] sm:$0xff]
    %v281 = vld [vmem:[#allocation5 + $0x510] sm:$0xff]
    %v282 = vld [vmem:[#allocation5 + $0x518] sm:$0xff]
    %v283 = vld [vmem:[#allocation5 + $0x520] sm:$0xff]
    %v284 = vld [vmem:[#allocation5 + $0x528] sm:$0xff]
    %v285 = vld [vmem:[#allocation5 + $0x530] sm:$0xff]
    %v286 = vld [vmem:[#allocation5 + $0x538] sm:$0xff]
    %v287 = vld [vmem:[#allocation5 + $0x540] sm:$0xff]
    %v288 = vld [vmem:[#allocation5 + $0x548] sm:$0xff]
    %v289 = vld [vmem:[#allocation5 + $0x550] sm:$0xff]
    %v290 = vld [vmem:[#allocation5 + $0x558] sm:$0xff]
    %v291 = vld [vmem:[#allocation5 + $0x560] sm:$0xff]
    %v292 = vld [vmem:[#allocation5 + $0x568] sm:$0xff]
    %v293 = vld [vmem:[#allocation5 + $0x570] sm:$0xff]
    %v294 = vld [vmem:[#allocation5 + $0x578] sm:$0xff]
    %v295 = vld [vmem:[#allocation5 + $0x580] sm:$0xff]
    %v296 = vld [vmem:[#allocation5 + $0x588] sm:$0xff]
    %v297 = vld [vmem:[#allocation5 + $0x590] sm:$0xff]
    %v298 = vld [vmem:[#allocation5 + $0x598] sm:$0xff]
    %v299 = vld [vmem:[#allocation5 + $0x5a0] sm:$0xff]
    %v300 = vld [vmem:[#allocation5 + $0x5a8] sm:$0xff]
    %v301 = vld [vmem:[#allocation5 + $0x5b0] sm:$0xff]
    %v302 = vld [vmem:[#allocation5 + $0x5b8] sm:$0xff]
    %v303 = vld [vmem:[#allocation5 + $0x5c0] sm:$0xff]
    %v304 = vld [vmem:[#allocation5 + $0x5c8] sm:$0xff]
    %v305 = vld [vmem:[#allocation5 + $0x5d0] sm:$0xff]
    %v306 = vld [vmem:[#allocation5 + $0x5d8] sm:$0xff]
    %v307 = vld [vmem:[#allocation5 + $0x5e0] sm:$0xff]
    %v308 = vld [vmem:[#allocation5 + $0x5e8] sm:$0xff]
    %v309 = vld [vmem:[#allocation5 + $0x5f0] sm:$0xff]
    %v310 = vld [vmem:[#allocation5 + $0x5f8] sm:$0xff]
    %v311 = vld [vmem:[#allocation5 + $0x600] sm:$0xff]
    %v312 = vld [vmem:[#allocation5 + $0x608] sm:$0xff]
    %v313 = vld [vmem:[#allocation5 + $0x610] sm:$0xff]
    %v314 = vld [vmem:[#allocation5 + $0x618] sm:$0xff]
    %v315 = vld [vmem:[#allocation5 + $0x620] sm:$0xff]
    %v316 = vld [vmem:[#allocation5 + $0x628] sm:$0xff]
    %v317 = vld [vmem:[#allocation5 + $0x630] sm:$0xff]
    %v318 = vld [vmem:[#allocation5 + $0x638] sm:$0xff]
    %v319 = vld [vmem:[#allocation5 + $0x640] sm:$0xff]
    %v320 = vld [vmem:[#allocation5 + $0x648] sm:$0xff]
    %v321 = vld [vmem:[#allocation5 + $0x650] sm:$0xff]
    %v322 = vld [vmem:[#allocation5 + $0x658] sm:$0xff]
    %v323 = vld [vmem:[#allocation5 + $0x660] sm:$0xff]
    %v324 = vld [vmem:[#allocation5 + $0x668] sm:$0xff]
    %v325 = vld [vmem:[#allocation5 + $0x670] sm:$0xff]
    %v326 = vld [vmem:[#allocation5 + $0x678] sm:$0xff]
    %v327 = vld [vmem:[#allocation5 + $0x680] sm:$0xff]
    %v328 = vld [vmem:[#allocation5 + $0x688] sm:$0xff]
    %v329 = vld [vmem:[#allocation5 + $0x690] sm:$0xff]
    %v330 = vld [vmem:[#allocation5 + $0x698] sm:$0xff]
    %v331 = vld [vmem:[#allocation5 + $0x6a0] sm:$0xff]
    %v332 = vld [vmem:[#allocation5 + $0x6a8] sm:$0xff]
    %v333 = vld [vmem:[#allocation5 + $0x6b0] sm:$0xff]
    %v334 = vld [vmem:[#allocation5 + $0x6b8] sm:$0xff]
    %v335 = vld [vmem:[#allocation5 + $0x6c0] sm:$0xff]
    %v336 = vld [vmem:[#allocation5 + $0x6c8] sm:$0xff]
    %v337 = vld [vmem:[#allocation5 + $0x6d0] sm:$0xff]
    %v338 = vld [vmem:[#allocation5 + $0x6d8] sm:$0xff]
    %v339 = vld [vmem:[#allocation5 + $0x6e0] sm:$0xff]
    %v340 = vld [vmem:[#allocation5 + $0x6e8] sm:$0xff]
    %v341 = vld [vmem:[#allocation5 + $0x6f0] sm:$0xff]
    %v342 = vld [vmem:[#allocation5 + $0x6f8] sm:$0xff]
    %v343 = vld [vmem:[#allocation7] sm:$0xf]
    %v345 = vperm.slane %v343, 0
    %v346 = vperm.slane %v343, 1
    %v347 = vperm.slane %v343, 2
    %v348 = vperm.slane %v343, 3
    %v357 = vunpack.c.l.b16 %v115
    %v358 = vunpack.c.h.b16 %v115
    %v359 = vunpack.c.l.b16 %v116
    %v360 = vunpack.c.h.b16 %v116
    %v361 = vunpack.c.l.b16 %v117
    %v362 = vunpack.c.h.b16 %v117
    %v363 = vunpack.c.l.b16 %v118
    %v364 = vpack.c.b16 %v357, %v357
    %v365 = vpack.c.b16 %v358, %v358
    %v366 = vpack.c.b16 %v359, %v359
    %v367 = vpack.c.b16 %v360, %v360
    %v368 = vpack.c.b16 %v361, %v361
    %v369 = vpack.c.b16 %v362, %v362
    %v370 = vpack.c.b16 %v363, %v363
    %v602 = vunpack.c.l.b16 %v119
    %v603 = vunpack.c.h.b16 %v119
    %v604 = vunpack.c.l.b16 %v120
    %v605 = vunpack.c.h.b16 %v120
    %v606 = vunpack.c.l.b16 %v121
    %v607 = vunpack.c.h.b16 %v121
    %v608 = vunpack.c.l.b16 %v122
    %v609 = vunpack.c.h.b16 %v122
    %v610 = vunpack.c.l.b16 %v123
    %v611 = vunpack.c.h.b16 %v123
    %v612 = vunpack.c.l.b16 %v124
    %v613 = vunpack.c.h.b16 %v124
    %v614 = vunpack.c.l.b16 %v125
    %v615 = vunpack.c.h.b16 %v125
    %v616 = vunpack.c.l.b16 %v126
    %v617 = vunpack.c.h.b16 %v126
    %v618 = vunpack.c.l.b16 %v127
    %v619 = vunpack.c.h.b16 %v127
    %v620 = vunpack.c.l.b16 %v128
    %v621 = vunpack.c.h.b16 %v128
    %v622 = vunpack.c.l.b16 %v129
    %v623 = vunpack.c.h.b16 %v129
    %v624 = vunpack.c.l.b16 %v130
    %v625 = vunpack.c.h.b16 %v130
    %v626 = vunpack.c.l.b16 %v131
    %v627 = vunpack.c.h.b16 %v131
    %v628 = vunpack.c.l.b16 %v132
    %v629 = vunpack.c.h.b16 %v132
    %v630 = vunpack.c.l.b16 %v133
    %v631 = vunpack.c.h.b16 %v133
    %v632 = vunpack.c.l.b16 %v134
    %v633 = vunpack.c.h.b16 %v134
    %v634 = vunpack.c.l.b16 %v135
    %v635 = vunpack.c.h.b16 %v135
    %v636 = vunpack.c.l.b16 %v136
    %v637 = vunpack.c.h.b16 %v136
    %v638 = vunpack.c.l.b16 %v137
    %v639 = vunpack.c.h.b16 %v137
    %v640 = vunpack.c.l.b16 %v138
    %v641 = vunpack.c.h.b16 %v138
    %v642 = vunpack.c.l.b16 %v139
    %v643 = vunpack.c.h.b16 %v139
    %v644 = vunpack.c.l.b16 %v140
    %v645 = vunpack.c.h.b16 %v140
    %v646 = vunpack.c.l.b16 %v141
    %v647 = vunpack.c.h.b16 %v141
    %v648 = vunpack.c.l.b16 %v142
    %v649 = vunpack.c.h.b16 %v142
    %v650 = vunpack.c.l.b16 %v143
    %v651 = vunpack.c.h.b16 %v143
    %v652 = vunpack.c.l.b16 %v144
    %v653 = vunpack.c.h.b16 %v144
    %v654 = vunpack.c.l.b16 %v145
    %v655 = vunpack.c.h.b16 %v145
    %v656 = vunpack.c.l.b16 %v146
    %v657 = vunpack.c.h.b16 %v146
    %v658 = vunpack.c.l.b16 %v147
    %v659 = vunpack.c.h.b16 %v147
    %v660 = vunpack.c.l.b16 %v148
    %v661 = vunpack.c.h.b16 %v148
    %v662 = vunpack.c.l.b16 %v149
    %v663 = vunpack.c.h.b16 %v149
    %v664 = vunpack.c.l.b16 %v150
    %v665 = vunpack.c.h.b16 %v150
    %v666 = vunpack.c.l.b16 %v151
    %v667 = vunpack.c.h.b16 %v151
    %v668 = vunpack.c.l.b16 %v152
    %v669 = vunpack.c.h.b16 %v152
    %v670 = vunpack.c.l.b16 %v153
    %v671 = vunpack.c.h.b16 %v153
    %v672 = vunpack.c.l.b16 %v154
    %v673 = vunpack.c.h.b16 %v154
    %v674 = vunpack.c.l.b16 %v155
    %v675 = vunpack.c.h.b16 %v155
    %v676 = vunpack.c.l.b16 %v156
    %v677 = vunpack.c.h.b16 %v156
    %v678 = vunpack.c.l.b16 %v157
    %v679 = vunpack.c.h.b16 %v157
    %v680 = vunpack.c.l.b16 %v158
    %v681 = vunpack.c.h.b16 %v158
    %v682 = vunpack.c.l.b16 %v159
    %v683 = vunpack.c.h.b16 %v159
    %v684 = vunpack.c.l.b16 %v160
    %v685 = vunpack.c.h.b16 %v160
    %v686 = vunpack.c.l.b16 %v161
    %v687 = vunpack.c.h.b16 %v161
    %v688 = vunpack.c.l.b16 %v162
    %v689 = vunpack.c.h.b16 %v162
    %v690 = vunpack.c.l.b16 %v163
    %v691 = vunpack.c.h.b16 %v163
    %v692 = vunpack.c.l.b16 %v164
    %v693 = vunpack.c.h.b16 %v164
    %v694 = vunpack.c.l.b16 %v165
    %v695 = vunpack.c.h.b16 %v165
    %v696 = vunpack.c.l.b16 %v166
    %v697 = vunpack.c.h.b16 %v166
    %v698 = vunpack.c.l.b16 %v167
    %v699 = vunpack.c.h.b16 %v167
    %v700 = vunpack.c.l.b16 %v168
    %v701 = vunpack.c.h.b16 %v168
    %v702 = vunpack.c.l.b16 %v169
    %v703 = vunpack.c.h.b16 %v169
    %v704 = vunpack.c.l.b16 %v170
    %v705 = vunpack.c.h.b16 %v170
    %v706 = vunpack.c.l.b16 %v171
    %v707 = vunpack.c.h.b16 %v171
    %v708 = vunpack.c.l.b16 %v172
    %v709 = vunpack.c.h.b16 %v172
    %v710 = vunpack.c.l.b16 %v173
    %v711 = vunpack.c.h.b16 %v173
    %v712 = vunpack.c.l.b16 %v174
    %v713 = vunpack.c.h.b16 %v174
    %v714 = vunpack.c.l.b16 %v175
    %v715 = vunpack.c.h.b16 %v175
    %v716 = vunpack.c.l.b16 %v176
    %v717 = vunpack.c.h.b16 %v176
    %v718 = vunpack.c.l.b16 %v177
    %v719 = vunpack.c.h.b16 %v177
    %v720 = vunpack.c.l.b16 %v178
    %v721 = vunpack.c.h.b16 %v178
    %v722 = vunpack.c.l.b16 %v179
    %v723 = vunpack.c.h.b16 %v179
    %v724 = vunpack.c.l.b16 %v180
    %v725 = vunpack.c.h.b16 %v180
    %v726 = vunpack.c.l.b16 %v181
    %v727 = vunpack.c.h.b16 %v181
    %v728 = vunpack.c.l.b16 %v182
    %v729 = vunpack.c.h.b16 %v182
    %v730 = vunpack.c.l.b16 %v183
    %v731 = vunpack.c.h.b16 %v183
    %v732 = vunpack.c.l.b16 %v184
    %v733 = vunpack.c.h.b16 %v184
    %v734 = vunpack.c.l.b16 %v185
    %v735 = vunpack.c.h.b16 %v185
    %v736 = vunpack.c.l.b16 %v186
    %v737 = vunpack.c.h.b16 %v186
    %v738 = vunpack.c.l.b16 %v187
    %v739 = vunpack.c.h.b16 %v187
    %v740 = vunpack.c.l.b16 %v188
    %v741 = vunpack.c.h.b16 %v188
    %v742 = vunpack.c.l.b16 %v189
    %v743 = vunpack.c.h.b16 %v189
    %v744 = vunpack.c.l.b16 %v190
    %v745 = vunpack.c.h.b16 %v190
    %v746 = vunpack.c.l.b16 %v191
    %v747 = vunpack.c.h.b16 %v191
    %v748 = vunpack.c.l.b16 %v192
    %v749 = vunpack.c.h.b16 %v192
    %v750 = vunpack.c.l.b16 %v193
    %v751 = vunpack.c.h.b16 %v193
    %v752 = vunpack.c.l.b16 %v194
    %v753 = vunpack.c.h.b16 %v194
    %v754 = vunpack.c.l.b16 %v195
    %v755 = vunpack.c.h.b16 %v195
    %v756 = vunpack.c.l.b16 %v196
    %v757 = vunpack.c.h.b16 %v196
    %v758 = vunpack.c.l.b16 %v197
    %v759 = vunpack.c.h.b16 %v197
    %v760 = vunpack.c.l.b16 %v198
    %v761 = vunpack.c.h.b16 %v198
    %v762 = vunpack.c.l.b16 %v199
    %v763 = vunpack.c.h.b16 %v199
    %v764 = vunpack.c.l.b16 %v200
    %v765 = vunpack.c.h.b16 %v200
    %v766 = vunpack.c.l.b16 %v201
    %v767 = vunpack.c.h.b16 %v201
    %v768 = vunpack.c.l.b16 %v202
    %v769 = vunpack.c.h.b16 %v202
    %v770 = vunpack.c.l.b16 %v203
    %v771 = vunpack.c.h.b16 %v203
    %v772 = vunpack.c.l.b16 %v204
    %v773 = vunpack.c.h.b16 %v204
    %v774 = vunpack.c.l.b16 %v205
    %v775 = vunpack.c.h.b16 %v205
    %v776 = vunpack.c.l.b16 %v206
    %v777 = vunpack.c.h.b16 %v206
    %v778 = vunpack.c.l.b16 %v207
    %v779 = vunpack.c.h.b16 %v207
    %v780 = vunpack.c.l.b16 %v208
    %v781 = vunpack.c.h.b16 %v208
    %v782 = vunpack.c.l.b16 %v209
    %v783 = vunpack.c.h.b16 %v209
    %v784 = vunpack.c.l.b16 %v210
    %v785 = vunpack.c.h.b16 %v210
    %v786 = vunpack.c.l.b16 %v211
    %v787 = vunpack.c.h.b16 %v211
    %v788 = vunpack.c.l.b16 %v212
    %v789 = vunpack.c.h.b16 %v212
    %v790 = vunpack.c.l.b16 %v213
    %v791 = vunpack.c.h.b16 %v213
    %v792 = vunpack.c.l.b16 %v214
    %v793 = vunpack.c.h.b16 %v214
    %v794 = vunpack.c.l.b16 %v215
    %v795 = vunpack.c.h.b16 %v215
    %v796 = vunpack.c.l.b16 %v216
    %v797 = vunpack.c.h.b16 %v216
    %v798 = vunpack.c.l.b16 %v217
    %v799 = vunpack.c.h.b16 %v217
    %v800 = vunpack.c.l.b16 %v218
    %v801 = vunpack.c.h.b16 %v218
    %v802 = vunpack.c.l.b16 %v219
    %v803 = vunpack.c.h.b16 %v219
    %v804 = vunpack.c.l.b16 %v220
    %v805 = vunpack.c.h.b16 %v220
    %v806 = vunpack.c.l.b16 %v221
    %v807 = vunpack.c.h.b16 %v221
    %v808 = vunpack.c.l.b16 %v222
    %v809 = vunpack.c.h.b16 %v222
    %v810 = vunpack.c.l.b16 %v223
    %v811 = vunpack.c.h.b16 %v223
    %v812 = vunpack.c.l.b16 %v224
    %v813 = vunpack.c.h.b16 %v224
    %v814 = vunpack.c.l.b16 %v225
    %v815 = vunpack.c.h.b16 %v225
    %v816 = vunpack.c.l.b16 %v226
    %v817 = vunpack.c.h.b16 %v226
    %v818 = vunpack.c.l.b16 %v227
    %v819 = vunpack.c.h.b16 %v227
    %v820 = vunpack.c.l.b16 %v228
    %v821 = vunpack.c.h.b16 %v228
    %v822 = vunpack.c.l.b16 %v229
    %v823 = vunpack.c.h.b16 %v229
    %v824 = vunpack.c.l.b16 %v230
    %v825 = vunpack.c.h.b16 %v230
    %v826 = vunpack.c.l.b16 %v231
    %v827 = vunpack.c.h.b16 %v231
    %v828 = vunpack.c.l.b16 %v232
    %v829 = vunpack.c.h.b16 %v232
    %v830 = vunpack.c.l.b16 %v233
    %v831 = vunpack.c.h.b16 %v233
    %v832 = vunpack.c.l.b16 %v234
    %v833 = vunpack.c.h.b16 %v234
    %v834 = vunpack.c.l.b16 %v235
    %v835 = vunpack.c.h.b16 %v235
    %v836 = vunpack.c.l.b16 %v236
    %v837 = vunpack.c.h.b16 %v236
    %v838 = vunpack.c.l.b16 %v237
    %v839 = vunpack.c.h.b16 %v237
    %v840 = vunpack.c.l.b16 %v238
    %v841 = vunpack.c.h.b16 %v238
    %v842 = vunpack.c.l.b16 %v239
    %v843 = vunpack.c.h.b16 %v239
    %v844 = vunpack.c.l.b16 %v240
    %v845 = vunpack.c.h.b16 %v240
    %v846 = vunpack.c.l.b16 %v241
    %v847 = vunpack.c.h.b16 %v241
    %v848 = vunpack.c.l.b16 %v242
    %v849 = vunpack.c.h.b16 %v242
    %v850 = vunpack.c.l.b16 %v243
    %v851 = vunpack.c.h.b16 %v243
    %v852 = vunpack.c.l.b16 %v244
    %v853 = vunpack.c.h.b16 %v244
    %v854 = vunpack.c.l.b16 %v245
    %v855 = vunpack.c.h.b16 %v245
    %v856 = vunpack.c.l.b16 %v246
    %v857 = vunpack.c.h.b16 %v246
    %v858 = vunpack.c.l.b16 %v247
    %v859 = vunpack.c.h.b16 %v247
    %v860 = vunpack.c.l.b16 %v248
    %v861 = vunpack.c.h.b16 %v248
    %v862 = vunpack.c.l.b16 %v249
    %v863 = vunpack.c.h.b16 %v249
    %v864 = vunpack.c.l.b16 %v250
    %v865 = vunpack.c.h.b16 %v250
    %v866 = vunpack.c.l.b16 %v251
    %v867 = vunpack.c.h.b16 %v251
    %v868 = vunpack.c.l.b16 %v252
    %v869 = vunpack.c.h.b16 %v252
    %v870 = vunpack.c.l.b16 %v253
    %v871 = vunpack.c.h.b16 %v253
    %v872 = vunpack.c.l.b16 %v254
    %v873 = vunpack.c.h.b16 %v254
    %v874 = vunpack.c.l.b16 %v255
    %v875 = vunpack.c.h.b16 %v255
    %v876 = vunpack.c.l.b16 %v256
    %v877 = vunpack.c.h.b16 %v256
    %v878 = vunpack.c.l.b16 %v257
    %v879 = vunpack.c.h.b16 %v257
    %v880 = vunpack.c.l.b16 %v258
    %v881 = vunpack.c.h.b16 %v258
    %v882 = vunpack.c.l.b16 %v259
    %v883 = vunpack.c.h.b16 %v259
    %v884 = vunpack.c.l.b16 %v260
    %v885 = vunpack.c.h.b16 %v260
    %v886 = vunpack.c.l.b16 %v261
    %v887 = vunpack.c.h.b16 %v261
    %v888 = vunpack.c.l.b16 %v262
    %v889 = vunpack.c.h.b16 %v262
    %v890 = vunpack.c.l.b16 %v263
    %v891 = vunpack.c.h.b16 %v263
    %v892 = vunpack.c.l.b16 %v264
    %v893 = vunpack.c.h.b16 %v264
    %v894 = vunpack.c.l.b16 %v265
    %v895 = vunpack.c.h.b16 %v265
    %v896 = vunpack.c.l.b16 %v266
    %v897 = vunpack.c.h.b16 %v266
    %v898 = vunpack.c.l.b16 %v267
    %v899 = vunpack.c.h.b16 %v267
    %v900 = vunpack.c.l.b16 %v268
    %v901 = vunpack.c.h.b16 %v268
    %v902 = vunpack.c.l.b16 %v269
    %v903 = vunpack.c.h.b16 %v269
    %v904 = vunpack.c.l.b16 %v270
    %v905 = vunpack.c.h.b16 %v270
    %v906 = vunpack.c.l.b16 %v271
    %v907 = vunpack.c.h.b16 %v271
    %v908 = vunpack.c.l.b16 %v272
    %v909 = vunpack.c.h.b16 %v272
    %v910 = vunpack.c.l.b16 %v273
    %v911 = vunpack.c.h.b16 %v273
    %v912 = vunpack.c.l.b16 %v274
    %v913 = vunpack.c.h.b16 %v274
    %v914 = vunpack.c.l.b16 %v275
    %v915 = vunpack.c.h.b16 %v275
    %v916 = vunpack.c.l.b16 %v276
    %v917 = vunpack.c.h.b16 %v276
    %v918 = vunpack.c.l.b16 %v277
    %v919 = vunpack.c.h.b16 %v277
    %v920 = vunpack.c.l.b16 %v278
    %v921 = vunpack.c.h.b16 %v278
    %v922 = vunpack.c.l.b16 %v279
    %v923 = vunpack.c.h.b16 %v279
    %v924 = vunpack.c.l.b16 %v280
    %v925 = vunpack.c.h.b16 %v280
    %v926 = vunpack.c.l.b16 %v281
    %v927 = vunpack.c.h.b16 %v281
    %v928 = vunpack.c.l.b16 %v282
    %v929 = vunpack.c.h.b16 %v282
    %v930 = vunpack.c.l.b16 %v283
    %v931 = vunpack.c.h.b16 %v283
    %v932 = vunpack.c.l.b16 %v284
    %v933 = vunpack.c.h.b16 %v284
    %v934 = vunpack.c.l.b16 %v285
    %v935 = vunpack.c.h.b16 %v285
    %v936 = vunpack.c.l.b16 %v286
    %v937 = vunpack.c.h.b16 %v286
    %v938 = vunpack.c.l.b16 %v287
    %v939 = vunpack.c.h.b16 %v287
    %v940 = vunpack.c.l.b16 %v288
    %v941 = vunpack.c.h.b16 %v288
    %v942 = vunpack.c.l.b16 %v289
    %v943 = vunpack.c.h.b16 %v289
    %v944 = vunpack.c.l.b16 %v290
    %v945 = vunpack.c.h.b16 %v290
    %v946 = vunpack.c.l.b16 %v291
    %v947 = vunpack.c.h.b16 %v291
    %v948 = vunpack.c.l.b16 %v292
    %v949 = vunpack.c.h.b16 %v292
    %v950 = vunpack.c.l.b16 %v293
    %v951 = vunpack.c.h.b16 %v293
    %v952 = vunpack.c.l.b16 %v294
    %v953 = vunpack.c.h.b16 %v294
    %v954 = vunpack.c.l.b16 %v295
    %v955 = vunpack.c.h.b16 %v295
    %v956 = vunpack.c.l.b16 %v296
    %v957 = vunpack.c.h.b16 %v296
    %v958 = vunpack.c.l.b16 %v297
    %v959 = vunpack.c.h.b16 %v297
    %v960 = vunpack.c.l.b16 %v298
    %v961 = vunpack.c.h.b16 %v298
    %v962 = vunpack.c.l.b16 %v299
    %v963 = vunpack.c.h.b16 %v299
    %v964 = vunpack.c.l.b16 %v300
    %v965 = vunpack.c.h.b16 %v300
    %v966 = vunpack.c.l.b16 %v301
    %v967 = vunpack.c.h.b16 %v301
    %v968 = vunpack.c.l.b16 %v302
    %v969 = vunpack.c.h.b16 %v302
    %v970 = vunpack.c.l.b16 %v303
    %v971 = vunpack.c.h.b16 %v303
    %v972 = vunpack.c.l.b16 %v304
    %v973 = vunpack.c.h.b16 %v304
    %v974 = vunpack.c.l.b16 %v305
    %v975 = vunpack.c.h.b16 %v305
    %v976 = vunpack.c.l.b16 %v306
    %v977 = vunpack.c.h.b16 %v306
    %v978 = vunpack.c.l.b16 %v307
    %v979 = vunpack.c.h.b16 %v307
    %v980 = vunpack.c.l.b16 %v308
    %v981 = vunpack.c.h.b16 %v308
    %v982 = vunpack.c.l.b16 %v309
    %v983 = vunpack.c.h.b16 %v309
    %v984 = vunpack.c.l.b16 %v310
    %v985 = vunpack.c.h.b16 %v310
    %v986 = vunpack.c.l.b16 %v311
    %v987 = vunpack.c.h.b16 %v311
    %v988 = vunpack.c.l.b16 %v312
    %v989 = vunpack.c.h.b16 %v312
    %v990 = vunpack.c.l.b16 %v313
    %v991 = vunpack.c.h.b16 %v313
    %v992 = vunpack.c.l.b16 %v314
    %v993 = vunpack.c.h.b16 %v314
    %v994 = vunpack.c.l.b16 %v315
    %v995 = vunpack.c.h.b16 %v315
    %v996 = vunpack.c.l.b16 %v316
    %v997 = vunpack.c.h.b16 %v316
    %v998 = vunpack.c.l.b16 %v317
    %v999 = vunpack.c.h.b16 %v317
    %v1000 = vunpack.c.l.b16 %v318
    %v1001 = vunpack.c.h.b16 %v318
    %v1002 = vunpack.c.l.b16 %v319
    %v1003 = vunpack.c.h.b16 %v319
    %v1004 = vunpack.c.l.b16 %v320
    %v1005 = vunpack.c.h.b16 %v320
    %v1006 = vunpack.c.l.b16 %v321
    %v1007 = vunpack.c.h.b16 %v321
    %v1008 = vunpack.c.l.b16 %v322
    %v1009 = vunpack.c.h.b16 %v322
    %v1010 = vunpack.c.l.b16 %v323
    %v1011 = vunpack.c.h.b16 %v323
    %v1012 = vunpack.c.l.b16 %v324
    %v1013 = vunpack.c.h.b16 %v324
    %v1014 = vunpack.c.l.b16 %v325
    %v1015 = vunpack.c.h.b16 %v325
    %v1016 = vunpack.c.l.b16 %v326
    %v1017 = vunpack.c.h.b16 %v326
    %v1018 = vunpack.c.l.b16 %v327
    %v1019 = vunpack.c.h.b16 %v327
    %v1020 = vunpack.c.l.b16 %v328
    %v1021 = vunpack.c.h.b16 %v328
    %v1022 = vunpack.c.l.b16 %v329
    %v1023 = vunpack.c.h.b16 %v329
    %v1024 = vunpack.c.l.b16 %v330
    %v1025 = vunpack.c.h.b16 %v330
    %v1026 = vunpack.c.l.b16 %v331
    %v1027 = vunpack.c.h.b16 %v331
    %v1028 = vunpack.c.l.b16 %v332
    %v1029 = vunpack.c.h.b16 %v332
    %v1030 = vunpack.c.l.b16 %v333
    %v1031 = vunpack.c.h.b16 %v333
    %v1032 = vunpack.c.l.b16 %v334
    %v1033 = vunpack.c.h.b16 %v334
    %v1034 = vunpack.c.l.b16 %v335
    %v1035 = vunpack.c.h.b16 %v335
    %v1036 = vunpack.c.l.b16 %v336
    %v1037 = vunpack.c.h.b16 %v336
    %v1038 = vunpack.c.l.b16 %v337
    %v1039 = vunpack.c.h.b16 %v337
    %v1040 = vunpack.c.l.b16 %v338
    %v1041 = vunpack.c.h.b16 %v338
    %v1042 = vunpack.c.l.b16 %v339
    %v1043 = vunpack.c.h.b16 %v339
    %v1044 = vunpack.c.l.b16 %v340
    %v1045 = vunpack.c.h.b16 %v340
    %v1046 = vunpack.c.l.b16 %v341
    %v1047 = vunpack.c.h.b16 %v341
    %v1048 = vunpack.c.l.b16 %v342
    %v1049 = vunpack.c.h.b16 %v342
    %v1050 = vpack.c.b16 %v606, %v602
    %v1051 = vpack.c.b16 %v607, %v603
    %v1052 = vpack.c.b16 %v608, %v604
    %v1053 = vpack.c.b16 %v609, %v605
    %v1054 = vpack.c.b16 %v614, %v610
    %v1055 = vpack.c.b16 %v615, %v611
    %v1056 = vpack.c.b16 %v616, %v612
    %v1057 = vpack.c.b16 %v617, %v613
    %v1058 = vpack.c.b16 %v622, %v618
    %v1059 = vpack.c.b16 %v623, %v619
    %v1060 = vpack.c.b16 %v624, %v620
    %v1061 = vpack.c.b16 %v625, %v621
    %v1062 = vpack.c.b16 %v630, %v626
    %v1063 = vpack.c.b16 %v631, %v627
    %v1064 = vpack.c.b16 %v632, %v628
    %v1065 = vpack.c.b16 %v633, %v629
    %v1066 = vpack.c.b16 %v638, %v634
    %v1067 = vpack.c.b16 %v639, %v635
    %v1068 = vpack.c.b16 %v640, %v636
    %v1069 = vpack.c.b16 %v641, %v637
    %v1070 = vpack.c.b16 %v646, %v642
    %v1071 = vpack.c.b16 %v647, %v643
    %v1072 = vpack.c.b16 %v648, %v644
    %v1073 = vpack.c.b16 %v649, %v645
    %v1074 = vpack.c.b16 %v654, %v650
    %v1075 = vpack.c.b16 %v655, %v651
    %v1076 = vpack.c.b16 %v656, %v652
    %v1077 = vpack.c.b16 %v657, %v653
    %v1078 = vpack.c.b16 %v662, %v658
    %v1079 = vpack.c.b16 %v663, %v659
    %v1080 = vpack.c.b16 %v664, %v660
    %v1081 = vpack.c.b16 %v665, %v661
    %v1082 = vpack.c.b16 %v670, %v666
    %v1083 = vpack.c.b16 %v671, %v667
    %v1084 = vpack.c.b16 %v672, %v668
    %v1085 = vpack.c.b16 %v673, %v669
    %v1086 = vpack.c.b16 %v678, %v674
    %v1087 = vpack.c.b16 %v679, %v675
    %v1088 = vpack.c.b16 %v680, %v676
    %v1089 = vpack.c.b16 %v681, %v677
    %v1090 = vpack.c.b16 %v686, %v682
    %v1091 = vpack.c.b16 %v687, %v683
    %v1092 = vpack.c.b16 %v688, %v684
    %v1093 = vpack.c.b16 %v689, %v685
    %v1094 = vpack.c.b16 %v694, %v690
    %v1095 = vpack.c.b16 %v695, %v691
    %v1096 = vpack.c.b16 %v696, %v692
    %v1097 = vpack.c.b16 %v697, %v693
    %v1098 = vpack.c.b16 %v702, %v698
    %v1099 = vpack.c.b16 %v703, %v699
    %v1100 = vpack.c.b16 %v704, %v700
    %v1101 = vpack.c.b16 %v705, %v701
    %v1102 = vpack.c.b16 %v710, %v706
    %v1103 = vpack.c.b16 %v711, %v707
    %v1104 = vpack.c.b16 %v712, %v708
    %v1105 = vpack.c.b16 %v713, %v709
    %v1106 = vpack.c.b16 %v718, %v714
    %v1107 = vpack.c.b16 %v719, %v715
    %v1108 = vpack.c.b16 %v720, %v716
    %v1109 = vpack.c.b16 %v721, %v717
    %v1110 = vpack.c.b16 %v726, %v722
    %v1111 = vpack.c.b16 %v727, %v723
    %v1112 = vpack.c.b16 %v728, %v724
    %v1113 = vpack.c.b16 %v729, %v725
    %v1114 = vpack.c.b16 %v734, %v730
    %v1115 = vpack.c.b16 %v735, %v731
    %v1116 = vpack.c.b16 %v736, %v732
    %v1117 = vpack.c.b16 %v737, %v733
    %v1118 = vpack.c.b16 %v742, %v738
    %v1119 = vpack.c.b16 %v743, %v739
    %v1120 = vpack.c.b16 %v744, %v740
    %v1121 = vpack.c.b16 %v745, %v741
    %v1122 = vpack.c.b16 %v750, %v746
    %v1123 = vpack.c.b16 %v751, %v747
    %v1124 = vpack.c.b16 %v752, %v748
    %v1125 = vpack.c.b16 %v753, %v749
    %v1126 = vpack.c.b16 %v758, %v754
    %v1127 = vpack.c.b16 %v759, %v755
    %v1128 = vpack.c.b16 %v760, %v756
    %v1129 = vpack.c.b16 %v761, %v757
    %v1130 = vpack.c.b16 %v766, %v762
    %v1131 = vpack.c.b16 %v767, %v763
    %v1132 = vpack.c.b16 %v768, %v764
    %v1133 = vpack.c.b16 %v769, %v765
    %v1134 = vpack.c.b16 %v774, %v770
    %v1135 = vpack.c.b16 %v775, %v771
    %v1136 = vpack.c.b16 %v776, %v772
    %v1137 = vpack.c.b16 %v777, %v773
    %v1138 = vpack.c.b16 %v782, %v778
    %v1139 = vpack.c.b16 %v783, %v779
    %v1140 = vpack.c.b16 %v784, %v780
    %v1141 = vpack.c.b16 %v785, %v781
    %v1142 = vpack.c.b16 %v790, %v786
    %v1143 = vpack.c.b16 %v791, %v787
    %v1144 = vpack.c.b16 %v792, %v788
    %v1145 = vpack.c.b16 %v793, %v789
    %v1146 = vpack.c.b16 %v798, %v794
    %v1147 = vpack.c.b16 %v799, %v795
    %v1148 = vpack.c.b16 %v800, %v796
    %v1149 = vpack.c.b16 %v801, %v797
    %v1150 = vpack.c.b16 %v806, %v802
    %v1151 = vpack.c.b16 %v807, %v803
    %v1152 = vpack.c.b16 %v808, %v804
    %v1153 = vpack.c.b16 %v809, %v805
    %v1154 = vpack.c.b16 %v814, %v810
    %v1155 = vpack.c.b16 %v815, %v811
    %v1156 = vpack.c.b16 %v816, %v812
    %v1157 = vpack.c.b16 %v817, %v813
    %v1158 = vpack.c.b16 %v822, %v818
    %v1159 = vpack.c.b16 %v823, %v819
    %v1160 = vpack.c.b16 %v824, %v820
    %v1161 = vpack.c.b16 %v825, %v821
    %v1162 = vpack.c.b16 %v830, %v826
    %v1163 = vpack.c.b16 %v831, %v827
    %v1164 = vpack.c.b16 %v832, %v828
    %v1165 = vpack.c.b16 %v833, %v829
    %v1166 = vpack.c.b16 %v838, %v834
    %v1167 = vpack.c.b16 %v839, %v835
    %v1168 = vpack.c.b16 %v840, %v836
    %v1169 = vpack.c.b16 %v841, %v837
    %v1170 = vpack.c.b16 %v846, %v842
    %v1171 = vpack.c.b16 %v847, %v843
    %v1172 = vpack.c.b16 %v848, %v844
    %v1173 = vpack.c.b16 %v849, %v845
    %v1174 = vpack.c.b16 %v854, %v850
    %v1175 = vpack.c.b16 %v855, %v851
    %v1176 = vpack.c.b16 %v856, %v852
    %v1177 = vpack.c.b16 %v857, %v853
    %v1178 = vpack.c.b16 %v862, %v858
    %v1179 = vpack.c.b16 %v863, %v859
    %v1180 = vpack.c.b16 %v864, %v860
    %v1181 = vpack.c.b16 %v865, %v861
    %v1182 = vpack.c.b16 %v870, %v866
    %v1183 = vpack.c.b16 %v871, %v867
    %v1184 = vpack.c.b16 %v872, %v868
    %v1185 = vpack.c.b16 %v873, %v869
    %v1186 = vpack.c.b16 %v878, %v874
    %v1187 = vpack.c.b16 %v879, %v875
    %v1188 = vpack.c.b16 %v880, %v876
    %v1189 = vpack.c.b16 %v881, %v877
    %v1190 = vpack.c.b16 %v886, %v882
    %v1191 = vpack.c.b16 %v887, %v883
    %v1192 = vpack.c.b16 %v888, %v884
    %v1193 = vpack.c.b16 %v889, %v885
    %v1194 = vpack.c.b16 %v894, %v890
    %v1195 = vpack.c.b16 %v895, %v891
    %v1196 = vpack.c.b16 %v896, %v892
    %v1197 = vpack.c.b16 %v897, %v893
    %v1198 = vpack.c.b16 %v902, %v898
    %v1199 = vpack.c.b16 %v903, %v899
    %v1200 = vpack.c.b16 %v904, %v900
    %v1201 = vpack.c.b16 %v905, %v901
    %v1202 = vpack.c.b16 %v910, %v906
    %v1203 = vpack.c.b16 %v911, %v907
    %v1204 = vpack.c.b16 %v912, %v908
    %v1205 = vpack.c.b16 %v913, %v909
    %v1206 = vpack.c.b16 %v918, %v914
    %v1207 = vpack.c.b16 %v919, %v915
    %v1208 = vpack.c.b16 %v920, %v916
    %v1209 = vpack.c.b16 %v921, %v917
    %v1210 = vpack.c.b16 %v926, %v922
    %v1211 = vpack.c.b16 %v927, %v923
    %v1212 = vpack.c.b16 %v928, %v924
    %v1213 = vpack.c.b16 %v929, %v925
    %v1214 = vpack.c.b16 %v934, %v930
    %v1215 = vpack.c.b16 %v935, %v931
    %v1216 = vpack.c.b16 %v936, %v932
    %v1217 = vpack.c.b16 %v937, %v933
    %v1218 = vpack.c.b16 %v942, %v938
    %v1219 = vpack.c.b16 %v943, %v939
    %v1220 = vpack.c.b16 %v944, %v940
    %v1221 = vpack.c.b16 %v945, %v941
    %v1222 = vpack.c.b16 %v950, %v946
    %v1223 = vpack.c.b16 %v951, %v947
    %v1224 = vpack.c.b16 %v952, %v948
    %v1225 = vpack.c.b16 %v953, %v949
    %v1226 = vpack.c.b16 %v958, %v954
    %v1227 = vpack.c.b16 %v959, %v955
    %v1228 = vpack.c.b16 %v960, %v956
    %v1229 = vpack.c.b16 %v961, %v957
    %v1230 = vpack.c.b16 %v966, %v962
    %v1231 = vpack.c.b16 %v967, %v963
    %v1232 = vpack.c.b16 %v968, %v964
    %v1233 = vpack.c.b16 %v969, %v965
    %v1234 = vpack.c.b16 %v974, %v970
    %v1235 = vpack.c.b16 %v975, %v971
    %v1236 = vpack.c.b16 %v976, %v972
    %v1237 = vpack.c.b16 %v977, %v973
    %v1238 = vpack.c.b16 %v982, %v978
    %v1239 = vpack.c.b16 %v983, %v979
    %v1240 = vpack.c.b16 %v984, %v980
    %v1241 = vpack.c.b16 %v985, %v981
    %v1242 = vpack.c.b16 %v990, %v986
    %v1243 = vpack.c.b16 %v991, %v987
    %v1244 = vpack.c.b16 %v992, %v988
    %v1245 = vpack.c.b16 %v993, %v989
    %v1246 = vpack.c.b16 %v998, %v994
    %v1247 = vpack.c.b16 %v999, %v995
    %v1248 = vpack.c.b16 %v1000, %v996
    %v1249 = vpack.c.b16 %v1001, %v997
    %v1250 = vpack.c.b16 %v1006, %v1002
    %v1251 = vpack.c.b16 %v1007, %v1003
    %v1252 = vpack.c.b16 %v1008, %v1004
    %v1253 = vpack.c.b16 %v1009, %v1005
    %v1254 = vpack.c.b16 %v1014, %v1010
    %v1255 = vpack.c.b16 %v1015, %v1011
    %v1256 = vpack.c.b16 %v1016, %v1012
    %v1257 = vpack.c.b16 %v1017, %v1013
    %v1258 = vpack.c.b16 %v1022, %v1018
    %v1259 = vpack.c.b16 %v1023, %v1019
    %v1260 = vpack.c.b16 %v1024, %v1020
    %v1261 = vpack.c.b16 %v1025, %v1021
    %v1262 = vpack.c.b16 %v1030, %v1026
    %v1263 = vpack.c.b16 %v1031, %v1027
    %v1264 = vpack.c.b16 %v1032, %v1028
    %v1265 = vpack.c.b16 %v1033, %v1029
    %v1266 = vpack.c.b16 %v1038, %v1034
    %v1267 = vpack.c.b16 %v1039, %v1035
    %v1268 = vpack.c.b16 %v1040, %v1036
    %v1269 = vpack.c.b16 %v1041, %v1037
    %v1270 = vpack.c.b16 %v1046, %v1042
    %v1271 = vpack.c.b16 %v1047, %v1043
    %v1272 = vpack.c.b16 %v1048, %v1044
    %v1273 = vpack.c.b16 %v1049, %v1045
    %1498 = vmatpush.bf16.msra.mxu0 %v1078
    %1499 = vmatpush.bf16.msra.mxu0 %v1074
    %1500 = vmatpush.bf16.msra.mxu0 %v1070
    %1501 = vmatpush.bf16.msra.mxu0 %v1066
    %1502 = vmatpush.bf16.msra.mxu0 %v1062
    %1503 = vmatpush.bf16.msra.mxu0 %v1058
    %1504 = vmatpush.bf16.msra.mxu0 %v1054
    %1505 = vmatpush.bf16.msra.mxu0 %v1050
    %1506 = vmatmul.bf16.gmra.mxu0 %v364
    %v1507 = vpop.f32.mrf.mxu0
    %v1508 = vadd.f32 %v345, %v1507
    %v1509 = vpop.f32.mrf.mxu0
    %1510 = vdwg.mxu0
    %1511 = vmatpush.bf16.msra.mxu0 %v1110
    %1512 = vmatpush.bf16.msra.mxu0 %v1106
    %1513 = vmatpush.bf16.msra.mxu0 %v1102
    %1514 = vmatpush.bf16.msra.mxu0 %v1098
    %1515 = vmatpush.bf16.msra.mxu0 %v1094
    %1516 = vmatpush.bf16.msra.mxu0 %v1090
    %1517 = vmatpush.bf16.msra.mxu0 %v1086
    %1518 = vmatpush.bf16.msra.mxu0 %v1082
    %1519 = vmatmul.bf16.gmra.mxu0 %v365
    %v1520 = vpop.f32.mrf.mxu0
    %v1521 = vadd.f32 %v1508, %v1520
    %v1522 = vpop.f32.mrf.mxu0
    %1523 = vdwg.mxu0
    %1524 = vmatpush.bf16.msra.mxu0 %v1142
    %1525 = vmatpush.bf16.msra.mxu0 %v1138
    %1526 = vmatpush.bf16.msra.mxu0 %v1134
    %1527 = vmatpush.bf16.msra.mxu0 %v1130
    %1528 = vmatpush.bf16.msra.mxu0 %v1126
    %1529 = vmatpush.bf16.msra.mxu0 %v1122
    %1530 = vmatpush.bf16.msra.mxu0 %v1118
    %1531 = vmatpush.bf16.msra.mxu0 %v1114
    %1532 = vmatmul.bf16.gmra.mxu0 %v366
    %v1533 = vpop.f32.mrf.mxu0
    %v1534 = vadd.f32 %v1521, %v1533
    %v1535 = vpop.f32.mrf.mxu0
    %1536 = vdwg.mxu0
    %1537 = vmatpush.bf16.msra.mxu0 %v1174
    %1538 = vmatpush.bf16.msra.mxu0 %v1170
    %1539 = vmatpush.bf16.msra.mxu0 %v1166
    %1540 = vmatpush.bf16.msra.mxu0 %v1162
    %1541 = vmatpush.bf16.msra.mxu0 %v1158
    %1542 = vmatpush.bf16.msra.mxu0 %v1154
    %1543 = vmatpush.bf16.msra.mxu0 %v1150
    %1544 = vmatpush.bf16.msra.mxu0 %v1146
    %1545 = vmatmul.bf16.gmra.mxu0 %v367
    %v1546 = vpop.f32.mrf.mxu0
    %v1547 = vadd.f32 %v1534, %v1546
    %v1548 = vpop.f32.mrf.mxu0
    %1549 = vdwg.mxu0
    %1550 = vmatpush.bf16.msra.mxu0 %v1206
    %1551 = vmatpush.bf16.msra.mxu0 %v1202
    %1552 = vmatpush.bf16.msra.mxu0 %v1198
    %1553 = vmatpush.bf16.msra.mxu0 %v1194
    %1554 = vmatpush.bf16.msra.mxu0 %v1190
    %1555 = vmatpush.bf16.msra.mxu0 %v1186
    %1556 = vmatpush.bf16.msra.mxu0 %v1182
    %1557 = vmatpush.bf16.msra.mxu0 %v1178
    %1558 = vmatmul.bf16.gmra.mxu0 %v368
    %v1559 = vpop.f32.mrf.mxu0
    %v1560 = vadd.f32 %v1547, %v1559
    %v1561 = vpop.f32.mrf.mxu0
    %1562 = vdwg.mxu0
    %1563 = vmatpush.bf16.msra.mxu0 %v1238
    %1564 = vmatpush.bf16.msra.mxu0 %v1234
    %1565 = vmatpush.bf16.msra.mxu0 %v1230
    %1566 = vmatpush.bf16.msra.mxu0 %v1226
    %1567 = vmatpush.bf16.msra.mxu0 %v1222
    %1568 = vmatpush.bf16.msra.mxu0 %v1218
    %1569 = vmatpush.bf16.msra.mxu0 %v1214
    %1570 = vmatpush.bf16.msra.mxu0 %v1210
    %1571 = vmatmul.bf16.gmra.mxu0 %v369
    %v1572 = vpop.f32.mrf.mxu0
    %v1573 = vadd.f32 %v1560, %v1572
    %v1574 = vpop.f32.mrf.mxu0
    %1575 = vdwg.mxu0
    %1576 = vmatpush.bf16.msra.mxu0 %v1270
    %1577 = vmatpush.bf16.msra.mxu0 %v1266
    %1578 = vmatpush.bf16.msra.mxu0 %v1262
    %1579 = vmatpush.bf16.msra.mxu0 %v1258
    %1580 = vmatpush.bf16.msra.mxu0 %v1254
    %1581 = vmatpush.bf16.msra.mxu0 %v1250
    %1582 = vmatpush.bf16.msra.mxu0 %v1246
    %1583 = vmatpush.bf16.msra.mxu0 %v1242
    %1584 = vmatmul.bf16.gmra.mxu0 %v370
    %v1585 = vpop.f32.mrf.mxu0
    %v1586 = vadd.f32 %v1573, %v1585
    %v1587 = vpop.f32.mrf.mxu0
    %1588 = vdwg.mxu0
    %1589 = vmatpush.bf16.msra.mxu0 %v1079
    %1590 = vmatpush.bf16.msra.mxu0 %v1075
    %1591 = vmatpush.bf16.msra.mxu0 %v1071
    %1592 = vmatpush.bf16.msra.mxu0 %v1067
    %1593 = vmatpush.bf16.msra.mxu0 %v1063
    %1594 = vmatpush.bf16.msra.mxu0 %v1059
    %1595 = vmatpush.bf16.msra.mxu0 %v1055
    %1596 = vmatpush.bf16.msra.mxu0 %v1051
    %1597 = vmatmul.bf16.gmra.mxu0 %v364
    %v1598 = vpop.f32.mrf.mxu0
    %v1599 = vadd.f32 %v346, %v1598
    %v1600 = vpop.f32.mrf.mxu0
    %1601 = vdwg.mxu0
    %1602 = vmatpush.bf16.msra.mxu0 %v1111
    %1603 = vmatpush.bf16.msra.mxu0 %v1107
    %1604 = vmatpush.bf16.msra.mxu0 %v1103
    %1605 = vmatpush.bf16.msra.mxu0 %v1099
    %1606 = vmatpush.bf16.msra.mxu0 %v1095
    %1607 = vmatpush.bf16.msra.mxu0 %v1091
    %1608 = vmatpush.bf16.msra.mxu0 %v1087
    %1609 = vmatpush.bf16.msra.mxu0 %v1083
    %1610 = vmatmul.bf16.gmra.mxu0 %v365
    %v1611 = vpop.f32.mrf.mxu0
    %v1612 = vadd.f32 %v1599, %v1611
    %v1613 = vpop.f32.mrf.mxu0
    %1614 = vdwg.mxu0
    %1615 = vmatpush.bf16.msra.mxu0 %v1143
    %1616 = vmatpush.bf16.msra.mxu0 %v1139
    %1617 = vmatpush.bf16.msra.mxu0 %v1135
    %1618 = vmatpush.bf16.msra.mxu0 %v1131
    %1619 = vmatpush.bf16.msra.mxu0 %v1127
    %1620 = vmatpush.bf16.msra.mxu0 %v1123
    %1621 = vmatpush.bf16.msra.mxu0 %v1119
    %1622 = vmatpush.bf16.msra.mxu0 %v1115
    %1623 = vmatmul.bf16.gmra.mxu0 %v366
    %v1624 = vpop.f32.mrf.mxu0
    %v1625 = vadd.f32 %v1612, %v1624
    %v1626 = vpop.f32.mrf.mxu0
    %1627 = vdwg.mxu0
    %1628 = vmatpush.bf16.msra.mxu0 %v1175
    %1629 = vmatpush.bf16.msra.mxu0 %v1171
    %1630 = vmatpush.bf16.msra.mxu0 %v1167
    %1631 = vmatpush.bf16.msra.mxu0 %v1163
    %1632 = vmatpush.bf16.msra.mxu0 %v1159
    %1633 = vmatpush.bf16.msra.mxu0 %v1155
    %1634 = vmatpush.bf16.msra.mxu0 %v1151
    %1635 = vmatpush.bf16.msra.mxu0 %v1147
    %1636 = vmatmul.bf16.gmra.mxu0 %v367
    %v1637 = vpop.f32.mrf.mxu0
    %v1638 = vadd.f32 %v1625, %v1637
    %v1639 = vpop.f32.mrf.mxu0
    %1640 = vdwg.mxu0
    %1641 = vmatpush.bf16.msra.mxu0 %v1207
    %1642 = vmatpush.bf16.msra.mxu0 %v1203
    %1643 = vmatpush.bf16.msra.mxu0 %v1199
    %1644 = vmatpush.bf16.msra.mxu0 %v1195
    %1645 = vmatpush.bf16.msra.mxu0 %v1191
    %1646 = vmatpush.bf16.msra.mxu0 %v1187
    %1647 = vmatpush.bf16.msra.mxu0 %v1183
    %1648 = vmatpush.bf16.msra.mxu0 %v1179
    %1649 = vmatmul.bf16.gmra.mxu0 %v368
    %v1650 = vpop.f32.mrf.mxu0
    %v1651 = vadd.f32 %v1638, %v1650
    %v1652 = vpop.f32.mrf.mxu0
    %1653 = vdwg.mxu0
    %1654 = vmatpush.bf16.msra.mxu0 %v1239
    %1655 = vmatpush.bf16.msra.mxu0 %v1235
    %1656 = vmatpush.bf16.msra.mxu0 %v1231
    %1657 = vmatpush.bf16.msra.mxu0 %v1227
    %1658 = vmatpush.bf16.msra.mxu0 %v1223
    %1659 = vmatpush.bf16.msra.mxu0 %v1219
    %1660 = vmatpush.bf16.msra.mxu0 %v1215
    %1661 = vmatpush.bf16.msra.mxu0 %v1211
    %1662 = vmatmul.bf16.gmra.mxu0 %v369
    %v1663 = vpop.f32.mrf.mxu0
    %v1664 = vadd.f32 %v1651, %v1663
    %v1665 = vpop.f32.mrf.mxu0
    %1666 = vdwg.mxu0
    %1667 = vmatpush.bf16.msra.mxu0 %v1271
    %1668 = vmatpush.bf16.msra.mxu0 %v1267
    %1669 = vmatpush.bf16.msra.mxu0 %v1263
    %1670 = vmatpush.bf16.msra.mxu0 %v1259
    %1671 = vmatpush.bf16.msra.mxu0 %v1255
    %1672 = vmatpush.bf16.msra.mxu0 %v1251
    %1673 = vmatpush.bf16.msra.mxu0 %v1247
    %1674 = vmatpush.bf16.msra.mxu0 %v1243
    %1675 = vmatmul.bf16.gmra.mxu0 %v370
    %v1676 = vpop.f32.mrf.mxu0
    %v1677 = vadd.f32 %v1664, %v1676
    %v1678 = vpop.f32.mrf.mxu0
    %1679 = vdwg.mxu0
    %1680 = vmatpush.bf16.msra.mxu0 %v1080
    %1681 = vmatpush.bf16.msra.mxu0 %v1076
    %1682 = vmatpush.bf16.msra.mxu0 %v1072
    %1683 = vmatpush.bf16.msra.mxu0 %v1068
    %1684 = vmatpush.bf16.msra.mxu0 %v1064
    %1685 = vmatpush.bf16.msra.mxu0 %v1060
    %1686 = vmatpush.bf16.msra.mxu0 %v1056
    %1687 = vmatpush.bf16.msra.mxu0 %v1052
    %1688 = vmatmul.bf16.gmra.mxu0 %v364
    %v1689 = vpop.f32.mrf.mxu0
    %v1690 = vadd.f32 %v347, %v1689
    %v1691 = vpop.f32.mrf.mxu0
    %1692 = vdwg.mxu0
    %1693 = vmatpush.bf16.msra.mxu0 %v1112
    %1694 = vmatpush.bf16.msra.mxu0 %v1108
    %1695 = vmatpush.bf16.msra.mxu0 %v1104
    %1696 = vmatpush.bf16.msra.mxu0 %v1100
    %1697 = vmatpush.bf16.msra.mxu0 %v1096
    %1698 = vmatpush.bf16.msra.mxu0 %v1092
    %1699 = vmatpush.bf16.msra.mxu0 %v1088
    %1700 = vmatpush.bf16.msra.mxu0 %v1084
    %1701 = vmatmul.bf16.gmra.mxu0 %v365
    %v1702 = vpop.f32.mrf.mxu0
    %v1703 = vadd.f32 %v1690, %v1702
    %v1704 = vpop.f32.mrf.mxu0
    %1705 = vdwg.mxu0
    %1706 = vmatpush.bf16.msra.mxu0 %v1144
    %1707 = vmatpush.bf16.msra.mxu0 %v1140
    %1708 = vmatpush.bf16.msra.mxu0 %v1136
    %1709 = vmatpush.bf16.msra.mxu0 %v1132
    %1710 = vmatpush.bf16.msra.mxu0 %v1128
    %1711 = vmatpush.bf16.msra.mxu0 %v1124
    %1712 = vmatpush.bf16.msra.mxu0 %v1120
    %1713 = vmatpush.bf16.msra.mxu0 %v1116
    %1714 = vmatmul.bf16.gmra.mxu0 %v366
    %v1715 = vpop.f32.mrf.mxu0
    %v1716 = vadd.f32 %v1703, %v1715
    %v1717 = vpop.f32.mrf.mxu0
    %1718 = vdwg.mxu0
    %1719 = vmatpush.bf16.msra.mxu0 %v1176
    %1720 = vmatpush.bf16.msra.mxu0 %v1172
    %1721 = vmatpush.bf16.msra.mxu0 %v1168
    %1722 = vmatpush.bf16.msra.mxu0 %v1164
    %1723 = vmatpush.bf16.msra.mxu0 %v1160
    %1724 = vmatpush.bf16.msra.mxu0 %v1156
    %1725 = vmatpush.bf16.msra.mxu0 %v1152
    %1726 = vmatpush.bf16.msra.mxu0 %v1148
    %1727 = vmatmul.bf16.gmra.mxu0 %v367
    %v1728 = vpop.f32.mrf.mxu0
    %v1729 = vadd.f32 %v1716, %v1728
    %v1730 = vpop.f32.mrf.mxu0
    %1731 = vdwg.mxu0
    %1732 = vmatpush.bf16.msra.mxu0 %v1208
    %1733 = vmatpush.bf16.msra.mxu0 %v1204
    %1734 = vmatpush.bf16.msra.mxu0 %v1200
    %1735 = vmatpush.bf16.msra.mxu0 %v1196
    %1736 = vmatpush.bf16.msra.mxu0 %v1192
    %1737 = vmatpush.bf16.msra.mxu0 %v1188
    %1738 = vmatpush.bf16.msra.mxu0 %v1184
    %1739 = vmatpush.bf16.msra.mxu0 %v1180
    %1740 = vmatmul.bf16.gmra.mxu0 %v368
    %v1741 = vpop.f32.mrf.mxu0
    %v1742 = vadd.f32 %v1729, %v1741
    %v1743 = vpop.f32.mrf.mxu0
    %1744 = vdwg.mxu0
    %1745 = vmatpush.bf16.msra.mxu0 %v1240
    %1746 = vmatpush.bf16.msra.mxu0 %v1236
    %1747 = vmatpush.bf16.msra.mxu0 %v1232
    %1748 = vmatpush.bf16.msra.mxu0 %v1228
    %1749 = vmatpush.bf16.msra.mxu0 %v1224
    %1750 = vmatpush.bf16.msra.mxu0 %v1220
    %1751 = vmatpush.bf16.msra.mxu0 %v1216
    %1752 = vmatpush.bf16.msra.mxu0 %v1212
    %1753 = vmatmul.bf16.gmra.mxu0 %v369
    %v1754 = vpop.f32.mrf.mxu0
    %v1755 = vadd.f32 %v1742, %v1754
    %v1756 = vpop.f32.mrf.mxu0
    %1757 = vdwg.mxu0
    %1758 = vmatpush.bf16.msra.mxu0 %v1272
    %1759 = vmatpush.bf16.msra.mxu0 %v1268
    %1760 = vmatpush.bf16.msra.mxu0 %v1264
    %1761 = vmatpush.bf16.msra.mxu0 %v1260
    %1762 = vmatpush.bf16.msra.mxu0 %v1256
    %1763 = vmatpush.bf16.msra.mxu0 %v1252
    %1764 = vmatpush.bf16.msra.mxu0 %v1248
    %1765 = vmatpush.bf16.msra.mxu0 %v1244
    %1766 = vmatmul.bf16.gmra.mxu0 %v370
    %v1767 = vpop.f32.mrf.mxu0
    %v1768 = vadd.f32 %v1755, %v1767
    %v1769 = vpop.f32.mrf.mxu0
    %1770 = vdwg.mxu0
    %1771 = vmatpush.bf16.msra.mxu0 %v1081
    %1772 = vmatpush.bf16.msra.mxu0 %v1077
    %1773 = vmatpush.bf16.msra.mxu0 %v1073
    %1774 = vmatpush.bf16.msra.mxu0 %v1069
    %1775 = vmatpush.bf16.msra.mxu0 %v1065
    %1776 = vmatpush.bf16.msra.mxu0 %v1061
    %1777 = vmatpush.bf16.msra.mxu0 %v1057
    %1778 = vmatpush.bf16.msra.mxu0 %v1053
    %1779 = vmatmul.bf16.gmra.mxu0 %v364
    %v1780 = vpop.f32.mrf.mxu0
    %v1781 = vadd.f32 %v348, %v1780
    %v1782 = vpop.f32.mrf.mxu0
    %1783 = vdwg.mxu0
    %1784 = vmatpush.bf16.msra.mxu0 %v1113
    %1785 = vmatpush.bf16.msra.mxu0 %v1109
    %1786 = vmatpush.bf16.msra.mxu0 %v1105
    %1787 = vmatpush.bf16.msra.mxu0 %v1101
    %1788 = vmatpush.bf16.msra.mxu0 %v1097
    %1789 = vmatpush.bf16.msra.mxu0 %v1093
    %1790 = vmatpush.bf16.msra.mxu0 %v1089
    %1791 = vmatpush.bf16.msra.mxu0 %v1085
    %1792 = vmatmul.bf16.gmra.mxu0 %v365
    %v1793 = vpop.f32.mrf.mxu0
    %v1794 = vadd.f32 %v1781, %v1793
    %v1795 = vpop.f32.mrf.mxu0
    %1796 = vdwg.mxu0
    %1797 = vmatpush.bf16.msra.mxu0 %v1145
    %1798 = vmatpush.bf16.msra.mxu0 %v1141
    %1799 = vmatpush.bf16.msra.mxu0 %v1137
    %1800 = vmatpush.bf16.msra.mxu0 %v1133
    %1801 = vmatpush.bf16.msra.mxu0 %v1129
    %1802 = vmatpush.bf16.msra.mxu0 %v1125
    %1803 = vmatpush.bf16.msra.mxu0 %v1121
    %1804 = vmatpush.bf16.msra.mxu0 %v1117
    %1805 = vmatmul.bf16.gmra.mxu0 %v366
    %v1806 = vpop.f32.mrf.mxu0
    %v1807 = vadd.f32 %v1794, %v1806
    %v1808 = vpop.f32.mrf.mxu0
    %1809 = vdwg.mxu0
    %1810 = vmatpush.bf16.msra.mxu0 %v1177
    %1811 = vmatpush.bf16.msra.mxu0 %v1173
    %1812 = vmatpush.bf16.msra.mxu0 %v1169
    %1813 = vmatpush.bf16.msra.mxu0 %v1165
    %1814 = vmatpush.bf16.msra.mxu0 %v1161
    %1815 = vmatpush.bf16.msra.mxu0 %v1157
    %1816 = vmatpush.bf16.msra.mxu0 %v1153
    %1817 = vmatpush.bf16.msra.mxu0 %v1149
    %1818 = vmatmul.bf16.gmra.mxu0 %v367
    %v1819 = vpop.f32.mrf.mxu0
    %v1820 = vadd.f32 %v1807, %v1819
    %v1821 = vpop.f32.mrf.mxu0
    %1822 = vdwg.mxu0
    %1823 = vmatpush.bf16.msra.mxu0 %v1209
    %1824 = vmatpush.bf16.msra.mxu0 %v1205
    %1825 = vmatpush.bf16.msra.mxu0 %v1201
    %1826 = vmatpush.bf16.msra.mxu0 %v1197
    %1827 = vmatpush.bf16.msra.mxu0 %v1193
    %1828 = vmatpush.bf16.msra.mxu0 %v1189
    %1829 = vmatpush.bf16.msra.mxu0 %v1185
    %1830 = vmatpush.bf16.msra.mxu0 %v1181
    %1831 = vmatmul.bf16.gmra.mxu0 %v368
    %v1832 = vpop.f32.mrf.mxu0
    %v1833 = vadd.f32 %v1820, %v1832
    %v1834 = vpop.f32.mrf.mxu0
    %1835 = vdwg.mxu0
    %1836 = vmatpush.bf16.msra.mxu0 %v1241
    %1837 = vmatpush.bf16.msra.mxu0 %v1237
    %1838 = vmatpush.bf16.msra.mxu0 %v1233
    %1839 = vmatpush.bf16.msra.mxu0 %v1229
    %1840 = vmatpush.bf16.msra.mxu0 %v1225
    %1841 = vmatpush.bf16.msra.mxu0 %v1221
    %1842 = vmatpush.bf16.msra.mxu0 %v1217
    %1843 = vmatpush.bf16.msra.mxu0 %v1213
    %1844 = vmatmul.bf16.gmra.mxu0 %v369
    %v1845 = vpop.f32.mrf.mxu0
    %v1846 = vadd.f32 %v1833, %v1845
    %v1847 = vpop.f32.mrf.mxu0
    %1848 = vdwg.mxu0
    %1849 = vmatpush.bf16.msra.mxu0 %v1273
    %1850 = vmatpush.bf16.msra.mxu0 %v1269
    %1851 = vmatpush.bf16.msra.mxu0 %v1265
    %1852 = vmatpush.bf16.msra.mxu0 %v1261
    %1853 = vmatpush.bf16.msra.mxu0 %v1257
    %1854 = vmatpush.bf16.msra.mxu0 %v1253
    %1855 = vmatpush.bf16.msra.mxu0 %v1249
    %1856 = vmatpush.bf16.msra.mxu0 %v1245
    %1857 = vmatmul.bf16.gmra.mxu0 %v370
    %v1858 = vpop.f32.mrf.mxu0
    %v1859 = vadd.f32 %v1846, %v1858
    %v1860 = vpop.f32.mrf.mxu0
    %1861 = vdwg.mxu0
    %v1862 = vmax.f32 %v1586, 0.0
    %v1863 = vmax.f32 %v1677, 0.0
    %v1864 = vmax.f32 %v1768, 0.0
    %v1865 = vmax.f32 %v1859, 0.0
    %v1866 = vpack.c.bf16 %v1862, %v1862
    %v1867 = vpack.c.bf16 %v1863, %v1863
    %v1868 = vpack.c.bf16 %v1864, %v1864
    %v1869 = vpack.c.bf16 %v1865, %v1865
    %v1870 = vld [vmem:[#allocation8] sm:$0xff]
    %v1871 = vld [vmem:[#allocation8 + $0x8] sm:$0xff]
    %v1872 = vld [vmem:[#allocation8 + $0x10] sm:$0xf]
    %v1873 = vld [vmem:[#allocation8 + $0x14] sm:$0xff]
    %v1874 = vld [vmem:[#allocation8 + $0x1c] sm:$0xff]
    %v1875 = vld [vmem:[#allocation8 + $0x24] sm:$0xf]
    %v1876 = vld [vmem:[#allocation8 + $0x28] sm:$0xff]
    %v1877 = vld [vmem:[#allocation8 + $0x30] sm:$0xff]
    %v1878 = vld [vmem:[#allocation8 + $0x38] sm:$0xf]
    %v1879 = vld [vmem:[#allocation8 + $0x3c] sm:$0xff]
    %v1880 = vld [vmem:[#allocation8 + $0x44] sm:$0xff]
    %v1881 = vld [vmem:[#allocation8 + $0x4c] sm:$0xf]
    %v1882 = vld [vmem:[#allocation8 + $0x50] sm:$0xff]
    %v1883 = vld [vmem:[#allocation8 + $0x58] sm:$0xff]
    %v1884 = vld [vmem:[#allocation8 + $0x60] sm:$0xf]
    %v1885 = vld [vmem:[#allocation8 + $0x64] sm:$0xff]
    %v1886 = vld [vmem:[#allocation8 + $0x6c] sm:$0xff]
    %v1887 = vld [vmem:[#allocation8 + $0x74] sm:$0xf]
    %v1888 = vld [vmem:[#allocation8 + $0x78] sm:$0xff]
    %v1889 = vld [vmem:[#allocation8 + $0x80] sm:$0xff]
    %v1890 = vld [vmem:[#allocation8 + $0x88] sm:$0xf]
    %v1891 = vld [vmem:[#allocation8 + $0x8c] sm:$0xff]
    %v1892 = vld [vmem:[#allocation8 + $0x94] sm:$0xff]
    %v1893 = vld [vmem:[#allocation8 + $0x9c] sm:$0xf]
    %v1894 = vld [vmem:[#allocation8 + $0xa0] sm:$0xff]
    %v1895 = vld [vmem:[#allocation8 + $0xa8] sm:$0xff]
    %v1896 = vld [vmem:[#allocation8 + $0xb0] sm:$0xf]
    %v1897 = vld [vmem:[#allocation8 + $0xb4] sm:$0xff]
    %v1898 = vld [vmem:[#allocation8 + $0xbc] sm:$0xff]
    %v1899 = vld [vmem:[#allocation8 + $0xc4] sm:$0xf]
    %v1900 = vld [vmem:[#allocation8 + $0xc8] sm:$0xff]
    %v1901 = vld [vmem:[#allocation8 + $0xd0] sm:$0xff]
    %v1902 = vld [vmem:[#allocation8 + $0xd8] sm:$0xf]
    %v1903 = vld [vmem:[#allocation8 + $0xdc] sm:$0xff]
    %v1904 = vld [vmem:[#allocation8 + $0xe4] sm:$0xff]
    %v1905 = vld [vmem:[#allocation8 + $0xec] sm:$0xf]
    %v1906 = vld [vmem:[#allocation8 + $0xf0] sm:$0xff]
    %v1907 = vld [vmem:[#allocation8 + $0xf8] sm:$0xff]
    %v1908 = vld [vmem:[#allocation8 + $0x100] sm:$0xf]
    %v1909 = vld [vmem:[#allocation8 + $0x104] sm:$0xff]
    %v1910 = vld [vmem:[#allocation8 + $0x10c] sm:$0xff]
    %v1911 = vld [vmem:[#allocation8 + $0x114] sm:$0xf]
    %v1912 = vld [vmem:[#allocation8 + $0x118] sm:$0xff]
    %v1913 = vld [vmem:[#allocation8 + $0x120] sm:$0xff]
    %v1914 = vld [vmem:[#allocation8 + $0x128] sm:$0xf]
    %v1915 = vld [vmem:[#allocation8 + $0x12c] sm:$0xff]
    %v1916 = vld [vmem:[#allocation8 + $0x134] sm:$0xff]
    %v1917 = vld [vmem:[#allocation8 + $0x13c] sm:$0xf]
    %v1918 = vld [vmem:[#allocation8 + $0x140] sm:$0xff]
    %v1919 = vld [vmem:[#allocation8 + $0x148] sm:$0xff]
    %v1920 = vld [vmem:[#allocation8 + $0x150] sm:$0xf]
    %v1921 = vld [vmem:[#allocation8 + $0x154] sm:$0xff]
    %v1922 = vld [vmem:[#allocation8 + $0x15c] sm:$0xff]
    %v1923 = vld [vmem:[#allocation8 + $0x164] sm:$0xf]
    %v1924 = vld [vmem:[#allocation8 + $0x168] sm:$0xff]
    %v1925 = vld [vmem:[#allocation8 + $0x170] sm:$0xff]
    %v1926 = vld [vmem:[#allocation8 + $0x178] sm:$0xf]
    %v1927 = vld [vmem:[#allocation8 + $0x17c] sm:$0xff]
    %v1928 = vld [vmem:[#allocation8 + $0x184] sm:$0xff]
    %v1929 = vld [vmem:[#allocation8 + $0x18c] sm:$0xf]
    %v1930 = vld [vmem:[#allocation8 + $0x190] sm:$0xff]
    %v1931 = vld [vmem:[#allocation8 + $0x198] sm:$0xff]
    %v1932 = vld [vmem:[#allocation8 + $0x1a0] sm:$0xf]
    %v1933 = vld [vmem:[#allocation8 + $0x1a4] sm:$0xff]
    %v1934 = vld [vmem:[#allocation8 + $0x1ac] sm:$0xff]
    %v1935 = vld [vmem:[#allocation8 + $0x1b4] sm:$0xf]
    %v1936 = vld [vmem:[#allocation8 + $0x1b8] sm:$0xff]
    %v1937 = vld [vmem:[#allocation8 + $0x1c0] sm:$0xff]
    %v1938 = vld [vmem:[#allocation8 + $0x1c8] sm:$0xf]
    %v1939 = vld [vmem:[#allocation8 + $0x1cc] sm:$0xff]
    %v1940 = vld [vmem:[#allocation8 + $0x1d4] sm:$0xff]
    %v1941 = vld [vmem:[#allocation8 + $0x1dc] sm:$0xf]
    %v1942 = vld [vmem:[#allocation8 + $0x1e0] sm:$0xff]
    %v1943 = vld [vmem:[#allocation8 + $0x1e8] sm:$0xff]
    %v1944 = vld [vmem:[#allocation8 + $0x1f0] sm:$0xf]
    %v1945 = vld [vmem:[#allocation8 + $0x1f4] sm:$0xff]
    %v1946 = vld [vmem:[#allocation8 + $0x1fc] sm:$0xff]
    %v1947 = vld [vmem:[#allocation8 + $0x204] sm:$0xf]
    %v1948 = vld [vmem:[#allocation8 + $0x208] sm:$0xff]
    %v1949 = vld [vmem:[#allocation8 + $0x210] sm:$0xff]
    %v1950 = vld [vmem:[#allocation8 + $0x218] sm:$0xf]
    %v1951 = vld [vmem:[#allocation8 + $0x21c] sm:$0xff]
    %v1952 = vld [vmem:[#allocation8 + $0x224] sm:$0xff]
    %v1953 = vld [vmem:[#allocation8 + $0x22c] sm:$0xf]
    %v1954 = vld [vmem:[#allocation8 + $0x230] sm:$0xff]
    %v1955 = vld [vmem:[#allocation8 + $0x238] sm:$0xff]
    %v1956 = vld [vmem:[#allocation8 + $0x240] sm:$0xf]
    %v1957 = vld [vmem:[#allocation8 + $0x244] sm:$0xff]
    %v1958 = vld [vmem:[#allocation8 + $0x24c] sm:$0xff]
    %v1959 = vld [vmem:[#allocation8 + $0x254] sm:$0xf]
    %v1960 = vld [vmem:[#allocation8 + $0x258] sm:$0xff]
    %v1961 = vld [vmem:[#allocation8 + $0x260] sm:$0xff]
    %v1962 = vld [vmem:[#allocation8 + $0x268] sm:$0xf]
    %v1963 = vld [vmem:[#allocation8 + $0x26c] sm:$0xff]
    %v1964 = vld [vmem:[#allocation8 + $0x274] sm:$0xff]
    %v1965 = vld [vmem:[#allocation8 + $0x27c] sm:$0xf]
    %v1966 = vld [vmem:[#allocation8 + $0x280] sm:$0xff]
    %v1967 = vld [vmem:[#allocation8 + $0x288] sm:$0xff]
    %v1968 = vld [vmem:[#allocation8 + $0x290] sm:$0xf]
    %v1969 = vld [vmem:[#allocation8 + $0x294] sm:$0xff]
    %v1970 = vld [vmem:[#allocation8 + $0x29c] sm:$0xff]
    %v1971 = vld [vmem:[#allocation8 + $0x2a4] sm:$0xf]
    %v1972 = vld [vmem:[#allocation8 + $0x2a8] sm:$0xff]
    %v1973 = vld [vmem:[#allocation8 + $0x2b0] sm:$0xff]
    %v1974 = vld [vmem:[#allocation8 + $0x2b8] sm:$0xf]
    %v1975 = vld [vmem:[#allocation8 + $0x2bc] sm:$0xff]
    %v1976 = vld [vmem:[#allocation8 + $0x2c4] sm:$0xff]
    %v1977 = vld [vmem:[#allocation8 + $0x2cc] sm:$0xf]
    %v1978 = vld [vmem:[#allocation8 + $0x2d0] sm:$0xff]
    %v1979 = vld [vmem:[#allocation8 + $0x2d8] sm:$0xff]
    %v1980 = vld [vmem:[#allocation8 + $0x2e0] sm:$0xf]
    %v1981 = vld [vmem:[#allocation8 + $0x2e4] sm:$0xff]
    %v1982 = vld [vmem:[#allocation8 + $0x2ec] sm:$0xff]
    %v1983 = vld [vmem:[#allocation8 + $0x2f4] sm:$0xf]
    %v1984 = vld [vmem:[#allocation8 + $0x2f8] sm:$0xff]
    %v1985 = vld [vmem:[#allocation8 + $0x300] sm:$0xff]
    %v1986 = vld [vmem:[#allocation8 + $0x308] sm:$0xf]
    %v1987 = vld [vmem:[#allocation8 + $0x30c] sm:$0xff]
    %v1988 = vld [vmem:[#allocation8 + $0x314] sm:$0xff]
    %v1989 = vld [vmem:[#allocation8 + $0x31c] sm:$0xf]
    %v1990 = vld [vmem:[#allocation8 + $0x320] sm:$0xff]
    %v1991 = vld [vmem:[#allocation8 + $0x328] sm:$0xff]
    %v1992 = vld [vmem:[#allocation8 + $0x330] sm:$0xf]
    %v1993 = vld [vmem:[#allocation8 + $0x334] sm:$0xff]
    %v1994 = vld [vmem:[#allocation8 + $0x33c] sm:$0xff]
    %v1995 = vld [vmem:[#allocation8 + $0x344] sm:$0xf]
    %v1996 = vld [vmem:[#allocation8 + $0x348] sm:$0xff]
    %v1997 = vld [vmem:[#allocation8 + $0x350] sm:$0xff]
    %v1998 = vld [vmem:[#allocation8 + $0x358] sm:$0xf]
    %v1999 = vld [vmem:[#allocation8 + $0x35c] sm:$0xff]
    %v2000 = vld [vmem:[#allocation8 + $0x364] sm:$0xff]
    %v2001 = vld [vmem:[#allocation8 + $0x36c] sm:$0xf]
    %v2002 = vld [vmem:[#allocation8 + $0x370] sm:$0xff]
    %v2003 = vld [vmem:[#allocation8 + $0x378] sm:$0xff]
    %v2004 = vld [vmem:[#allocation8 + $0x380] sm:$0xf]
    %v2005 = vld [vmem:[#allocation8 + $0x384] sm:$0xff]
    %v2006 = vld [vmem:[#allocation8 + $0x38c] sm:$0xff]
    %v2007 = vld [vmem:[#allocation8 + $0x394] sm:$0xf]
    %v2008 = vld [vmem:[#allocation8 + $0x398] sm:$0xff]
    %v2009 = vld [vmem:[#allocation8 + $0x3a0] sm:$0xff]
    %v2010 = vld [vmem:[#allocation8 + $0x3a8] sm:$0xf]
    %v2011 = vld [vmem:[#allocation8 + $0x3ac] sm:$0xff]
    %v2012 = vld [vmem:[#allocation8 + $0x3b4] sm:$0xff]
    %v2013 = vld [vmem:[#allocation8 + $0x3bc] sm:$0xf]
    %v2014 = vld [vmem:[#allocation8 + $0x3c0] sm:$0xff]
    %v2015 = vld [vmem:[#allocation8 + $0x3c8] sm:$0xff]
    %v2016 = vld [vmem:[#allocation8 + $0x3d0] sm:$0xf]
    %v2017 = vld [vmem:[#allocation8 + $0x3d4] sm:$0xff]
    %v2018 = vld [vmem:[#allocation8 + $0x3dc] sm:$0xff]
    %v2019 = vld [vmem:[#allocation8 + $0x3e4] sm:$0xf]
    %v2020 = vld [vmem:[#allocation8 + $0x3e8] sm:$0xff]
    %v2021 = vld [vmem:[#allocation8 + $0x3f0] sm:$0xff]
    %v2022 = vld [vmem:[#allocation8 + $0x3f8] sm:$0xf]
    %v2023 = vld [vmem:[#allocation8 + $0x3fc] sm:$0xff]
    %v2024 = vld [vmem:[#allocation8 + $0x404] sm:$0xff]
    %v2025 = vld [vmem:[#allocation8 + $0x40c] sm:$0xf]
    %v2026 = vld [vmem:[#allocation8 + $0x410] sm:$0xff]
    %v2027 = vld [vmem:[#allocation8 + $0x418] sm:$0xff]
    %v2028 = vld [vmem:[#allocation8 + $0x420] sm:$0xf]
    %v2029 = vld [vmem:[#allocation8 + $0x424] sm:$0xff]
    %v2030 = vld [vmem:[#allocation8 + $0x42c] sm:$0xff]
    %v2031 = vld [vmem:[#allocation8 + $0x434] sm:$0xf]
    %v2032 = vld [vmem:[#allocation8 + $0x438] sm:$0xff]
    %v2033 = vld [vmem:[#allocation8 + $0x440] sm:$0xff]
    %v2034 = vld [vmem:[#allocation8 + $0x448] sm:$0xf]
    %v2035 = vld [vmem:[#allocation8 + $0x44c] sm:$0xff]
    %v2036 = vld [vmem:[#allocation8 + $0x454] sm:$0xff]
    %v2037 = vld [vmem:[#allocation8 + $0x45c] sm:$0xf]
    %v2038 = vld [vmem:[#allocation8 + $0x460] sm:$0xff]
    %v2039 = vld [vmem:[#allocation8 + $0x468] sm:$0xff]
    %v2040 = vld [vmem:[#allocation8 + $0x470] sm:$0xf]
    %v2041 = vld [vmem:[#allocation8 + $0x474] sm:$0xff]
    %v2042 = vld [vmem:[#allocation8 + $0x47c] sm:$0xff]
    %v2043 = vld [vmem:[#allocation8 + $0x484] sm:$0xf]
    %v2044 = vld [vmem:[#allocation8 + $0x488] sm:$0xff]
    %v2045 = vld [vmem:[#allocation8 + $0x490] sm:$0xff]
    %v2046 = vld [vmem:[#allocation8 + $0x498] sm:$0xf]
    %v2047 = vld [vmem:[#allocation8 + $0x49c] sm:$0xff]
    %v2048 = vld [vmem:[#allocation8 + $0x4a4] sm:$0xff]
    %v2049 = vld [vmem:[#allocation8 + $0x4ac] sm:$0xf]
    %v2050 = vld [vmem:[#allocation8 + $0x4b0] sm:$0xff]
    %v2051 = vld [vmem:[#allocation8 + $0x4b8] sm:$0xff]
    %v2052 = vld [vmem:[#allocation8 + $0x4c0] sm:$0xf]
    %v2053 = vld [vmem:[#allocation8 + $0x4c4] sm:$0xff]
    %v2054 = vld [vmem:[#allocation8 + $0x4cc] sm:$0xff]
    %v2055 = vld [vmem:[#allocation8 + $0x4d4] sm:$0xf]
    %v2056 = vld [vmem:[#allocation8 + $0x4d8] sm:$0xff]
    %v2057 = vld [vmem:[#allocation8 + $0x4e0] sm:$0xff]
    %v2058 = vld [vmem:[#allocation8 + $0x4e8] sm:$0xf]
    %v2059 = vld [vmem:[#allocation8 + $0x4ec] sm:$0xff]
    %v2060 = vld [vmem:[#allocation8 + $0x4f4] sm:$0xff]
    %v2061 = vld [vmem:[#allocation8 + $0x4fc] sm:$0xf]
    %v2062 = vld [vmem:[#allocation10] sm:$0x1f]
    %v2064 = vperm.slane %v2062, 0
    %v2065 = vperm.slane %v2062, 1
    %v2066 = vperm.slane %v2062, 2
    %v2067 = vperm.slane %v2062, 3
    %v2068 = vperm.slane %v2062, 4
    %v2266 = vunpack.c.l.b16 %v1870
    %v2267 = vunpack.c.h.b16 %v1870
    %v2268 = vunpack.c.l.b16 %v1871
    %v2269 = vunpack.c.h.b16 %v1871
    %v2270 = vunpack.c.l.b16 %v1872
    %v2271 = vunpack.c.l.b16 %v1873
    %v2272 = vunpack.c.h.b16 %v1873
    %v2273 = vunpack.c.l.b16 %v1874
    %v2274 = vunpack.c.h.b16 %v1874
    %v2275 = vunpack.c.l.b16 %v1875
    %v2276 = vunpack.c.l.b16 %v1876
    %v2277 = vunpack.c.h.b16 %v1876
    %v2278 = vunpack.c.l.b16 %v1877
    %v2279 = vunpack.c.h.b16 %v1877
    %v2280 = vunpack.c.l.b16 %v1878
    %v2281 = vunpack.c.l.b16 %v1879
    %v2282 = vunpack.c.h.b16 %v1879
    %v2283 = vunpack.c.l.b16 %v1880
    %v2284 = vunpack.c.h.b16 %v1880
    %v2285 = vunpack.c.l.b16 %v1881
    %v2286 = vunpack.c.l.b16 %v1882
    %v2287 = vunpack.c.h.b16 %v1882
    %v2288 = vunpack.c.l.b16 %v1883
    %v2289 = vunpack.c.h.b16 %v1883
    %v2290 = vunpack.c.l.b16 %v1884
    %v2291 = vunpack.c.l.b16 %v1885
    %v2292 = vunpack.c.h.b16 %v1885
    %v2293 = vunpack.c.l.b16 %v1886
    %v2294 = vunpack.c.h.b16 %v1886
    %v2295 = vunpack.c.l.b16 %v1887
    %v2296 = vunpack.c.l.b16 %v1888
    %v2297 = vunpack.c.h.b16 %v1888
    %v2298 = vunpack.c.l.b16 %v1889
    %v2299 = vunpack.c.h.b16 %v1889
    %v2300 = vunpack.c.l.b16 %v1890
    %v2301 = vunpack.c.l.b16 %v1891
    %v2302 = vunpack.c.h.b16 %v1891
    %v2303 = vunpack.c.l.b16 %v1892
    %v2304 = vunpack.c.h.b16 %v1892
    %v2305 = vunpack.c.l.b16 %v1893
    %v2306 = vunpack.c.l.b16 %v1894
    %v2307 = vunpack.c.h.b16 %v1894
    %v2308 = vunpack.c.l.b16 %v1895
    %v2309 = vunpack.c.h.b16 %v1895
    %v2310 = vunpack.c.l.b16 %v1896
    %v2311 = vunpack.c.l.b16 %v1897
    %v2312 = vunpack.c.h.b16 %v1897
    %v2313 = vunpack.c.l.b16 %v1898
    %v2314 = vunpack.c.h.b16 %v1898
    %v2315 = vunpack.c.l.b16 %v1899
    %v2316 = vunpack.c.l.b16 %v1900
    %v2317 = vunpack.c.h.b16 %v1900
    %v2318 = vunpack.c.l.b16 %v1901
    %v2319 = vunpack.c.h.b16 %v1901
    %v2320 = vunpack.c.l.b16 %v1902
    %v2321 = vunpack.c.l.b16 %v1903
    %v2322 = vunpack.c.h.b16 %v1903
    %v2323 = vunpack.c.l.b16 %v1904
    %v2324 = vunpack.c.h.b16 %v1904
    %v2325 = vunpack.c.l.b16 %v1905
    %v2326 = vunpack.c.l.b16 %v1906
    %v2327 = vunpack.c.h.b16 %v1906
    %v2328 = vunpack.c.l.b16 %v1907
    %v2329 = vunpack.c.h.b16 %v1907
    %v2330 = vunpack.c.l.b16 %v1908
    %v2331 = vunpack.c.l.b16 %v1909
    %v2332 = vunpack.c.h.b16 %v1909
    %v2333 = vunpack.c.l.b16 %v1910
    %v2334 = vunpack.c.h.b16 %v1910
    %v2335 = vunpack.c.l.b16 %v1911
    %v2336 = vunpack.c.l.b16 %v1912
    %v2337 = vunpack.c.h.b16 %v1912
    %v2338 = vunpack.c.l.b16 %v1913
    %v2339 = vunpack.c.h.b16 %v1913
    %v2340 = vunpack.c.l.b16 %v1914
    %v2341 = vunpack.c.l.b16 %v1915
    %v2342 = vunpack.c.h.b16 %v1915
    %v2343 = vunpack.c.l.b16 %v1916
    %v2344 = vunpack.c.h.b16 %v1916
    %v2345 = vunpack.c.l.b16 %v1917
    %v2346 = vunpack.c.l.b16 %v1918
    %v2347 = vunpack.c.h.b16 %v1918
    %v2348 = vunpack.c.l.b16 %v1919
    %v2349 = vunpack.c.h.b16 %v1919
    %v2350 = vunpack.c.l.b16 %v1920
    %v2351 = vunpack.c.l.b16 %v1921
    %v2352 = vunpack.c.h.b16 %v1921
    %v2353 = vunpack.c.l.b16 %v1922
    %v2354 = vunpack.c.h.b16 %v1922
    %v2355 = vunpack.c.l.b16 %v1923
    %v2356 = vunpack.c.l.b16 %v1924
    %v2357 = vunpack.c.h.b16 %v1924
    %v2358 = vunpack.c.l.b16 %v1925
    %v2359 = vunpack.c.h.b16 %v1925
    %v2360 = vunpack.c.l.b16 %v1926
    %v2361 = vunpack.c.l.b16 %v1927
    %v2362 = vunpack.c.h.b16 %v1927
    %v2363 = vunpack.c.l.b16 %v1928
    %v2364 = vunpack.c.h.b16 %v1928
    %v2365 = vunpack.c.l.b16 %v1929
    %v2366 = vunpack.c.l.b16 %v1930
    %v2367 = vunpack.c.h.b16 %v1930
    %v2368 = vunpack.c.l.b16 %v1931
    %v2369 = vunpack.c.h.b16 %v1931
    %v2370 = vunpack.c.l.b16 %v1932
    %v2371 = vunpack.c.l.b16 %v1933
    %v2372 = vunpack.c.h.b16 %v1933
    %v2373 = vunpack.c.l.b16 %v1934
    %v2374 = vunpack.c.h.b16 %v1934
    %v2375 = vunpack.c.l.b16 %v1935
    %v2376 = vunpack.c.l.b16 %v1936
    %v2377 = vunpack.c.h.b16 %v1936
    %v2378 = vunpack.c.l.b16 %v1937
    %v2379 = vunpack.c.h.b16 %v1937
    %v2380 = vunpack.c.l.b16 %v1938
    %v2381 = vunpack.c.l.b16 %v1939
    %v2382 = vunpack.c.h.b16 %v1939
    %v2383 = vunpack.c.l.b16 %v1940
    %v2384 = vunpack.c.h.b16 %v1940
    %v2385 = vunpack.c.l.b16 %v1941
    %v2386 = vunpack.c.l.b16 %v1942
    %v2387 = vunpack.c.h.b16 %v1942
    %v2388 = vunpack.c.l.b16 %v1943
    %v2389 = vunpack.c.h.b16 %v1943
    %v2390 = vunpack.c.l.b16 %v1944
    %v2391 = vunpack.c.l.b16 %v1945
    %v2392 = vunpack.c.h.b16 %v1945
    %v2393 = vunpack.c.l.b16 %v1946
    %v2394 = vunpack.c.h.b16 %v1946
    %v2395 = vunpack.c.l.b16 %v1947
    %v2396 = vunpack.c.l.b16 %v1948
    %v2397 = vunpack.c.h.b16 %v1948
    %v2398 = vunpack.c.l.b16 %v1949
    %v2399 = vunpack.c.h.b16 %v1949
    %v2400 = vunpack.c.l.b16 %v1950
    %v2401 = vunpack.c.l.b16 %v1951
    %v2402 = vunpack.c.h.b16 %v1951
    %v2403 = vunpack.c.l.b16 %v1952
    %v2404 = vunpack.c.h.b16 %v1952
    %v2405 = vunpack.c.l.b16 %v1953
    %v2406 = vunpack.c.l.b16 %v1954
    %v2407 = vunpack.c.h.b16 %v1954
    %v2408 = vunpack.c.l.b16 %v1955
    %v2409 = vunpack.c.h.b16 %v1955
    %v2410 = vunpack.c.l.b16 %v1956
    %v2411 = vunpack.c.l.b16 %v1957
    %v2412 = vunpack.c.h.b16 %v1957
    %v2413 = vunpack.c.l.b16 %v1958
    %v2414 = vunpack.c.h.b16 %v1958
    %v2415 = vunpack.c.l.b16 %v1959
    %v2416 = vunpack.c.l.b16 %v1960
    %v2417 = vunpack.c.h.b16 %v1960
    %v2418 = vunpack.c.l.b16 %v1961
    %v2419 = vunpack.c.h.b16 %v1961
    %v2420 = vunpack.c.l.b16 %v1962
    %v2421 = vunpack.c.l.b16 %v1963
    %v2422 = vunpack.c.h.b16 %v1963
    %v2423 = vunpack.c.l.b16 %v1964
    %v2424 = vunpack.c.h.b16 %v1964
    %v2425 = vunpack.c.l.b16 %v1965
    %v2426 = vunpack.c.l.b16 %v1966
    %v2427 = vunpack.c.h.b16 %v1966
    %v2428 = vunpack.c.l.b16 %v1967
    %v2429 = vunpack.c.h.b16 %v1967
    %v2430 = vunpack.c.l.b16 %v1968
    %v2431 = vunpack.c.l.b16 %v1969
    %v2432 = vunpack.c.h.b16 %v1969
    %v2433 = vunpack.c.l.b16 %v1970
    %v2434 = vunpack.c.h.b16 %v1970
    %v2435 = vunpack.c.l.b16 %v1971
    %v2436 = vunpack.c.l.b16 %v1972
    %v2437 = vunpack.c.h.b16 %v1972
    %v2438 = vunpack.c.l.b16 %v1973
    %v2439 = vunpack.c.h.b16 %v1973
    %v2440 = vunpack.c.l.b16 %v1974
    %v2441 = vunpack.c.l.b16 %v1975
    %v2442 = vunpack.c.h.b16 %v1975
    %v2443 = vunpack.c.l.b16 %v1976
    %v2444 = vunpack.c.h.b16 %v1976
    %v2445 = vunpack.c.l.b16 %v1977
    %v2446 = vunpack.c.l.b16 %v1978
    %v2447 = vunpack.c.h.b16 %v1978
    %v2448 = vunpack.c.l.b16 %v1979
    %v2449 = vunpack.c.h.b16 %v1979
    %v2450 = vunpack.c.l.b16 %v1980
    %v2451 = vunpack.c.l.b16 %v1981
    %v2452 = vunpack.c.h.b16 %v1981
    %v2453 = vunpack.c.l.b16 %v1982
    %v2454 = vunpack.c.h.b16 %v1982
    %v2455 = vunpack.c.l.b16 %v1983
    %v2456 = vunpack.c.l.b16 %v1984
    %v2457 = vunpack.c.h.b16 %v1984
    %v2458 = vunpack.c.l.b16 %v1985
    %v2459 = vunpack.c.h.b16 %v1985
    %v2460 = vunpack.c.l.b16 %v1986
    %v2461 = vunpack.c.l.b16 %v1987
    %v2462 = vunpack.c.h.b16 %v1987
    %v2463 = vunpack.c.l.b16 %v1988
    %v2464 = vunpack.c.h.b16 %v1988
    %v2465 = vunpack.c.l.b16 %v1989
    %v2466 = vunpack.c.l.b16 %v1990
    %v2467 = vunpack.c.h.b16 %v1990
    %v2468 = vunpack.c.l.b16 %v1991
    %v2469 = vunpack.c.h.b16 %v1991
    %v2470 = vunpack.c.l.b16 %v1992
    %v2471 = vunpack.c.l.b16 %v1993
    %v2472 = vunpack.c.h.b16 %v1993
    %v2473 = vunpack.c.l.b16 %v1994
    %v2474 = vunpack.c.h.b16 %v1994
    %v2475 = vunpack.c.l.b16 %v1995
    %v2476 = vunpack.c.l.b16 %v1996
    %v2477 = vunpack.c.h.b16 %v1996
    %v2478 = vunpack.c.l.b16 %v1997
    %v2479 = vunpack.c.h.b16 %v1997
    %v2480 = vunpack.c.l.b16 %v1998
    %v2481 = vunpack.c.l.b16 %v1999
    %v2482 = vunpack.c.h.b16 %v1999
    %v2483 = vunpack.c.l.b16 %v2000
    %v2484 = vunpack.c.h.b16 %v2000
    %v2485 = vunpack.c.l.b16 %v2001
    %v2486 = vunpack.c.l.b16 %v2002
    %v2487 = vunpack.c.h.b16 %v2002
    %v2488 = vunpack.c.l.b16 %v2003
    %v2489 = vunpack.c.h.b16 %v2003
    %v2490 = vunpack.c.l.b16 %v2004
    %v2491 = vunpack.c.l.b16 %v2005
    %v2492 = vunpack.c.h.b16 %v2005
    %v2493 = vunpack.c.l.b16 %v2006
    %v2494 = vunpack.c.h.b16 %v2006
    %v2495 = vunpack.c.l.b16 %v2007
    %v2496 = vunpack.c.l.b16 %v2008
    %v2497 = vunpack.c.h.b16 %v2008
    %v2498 = vunpack.c.l.b16 %v2009
    %v2499 = vunpack.c.h.b16 %v2009
    %v2500 = vunpack.c.l.b16 %v2010
    %v2501 = vunpack.c.l.b16 %v2011
    %v2502 = vunpack.c.h.b16 %v2011
    %v2503 = vunpack.c.l.b16 %v2012
    %v2504 = vunpack.c.h.b16 %v2012
    %v2505 = vunpack.c.l.b16 %v2013
    %v2506 = vunpack.c.l.b16 %v2014
    %v2507 = vunpack.c.h.b16 %v2014
    %v2508 = vunpack.c.l.b16 %v2015
    %v2509 = vunpack.c.h.b16 %v2015
    %v2510 = vunpack.c.l.b16 %v2016
    %v2511 = vunpack.c.l.b16 %v2017
    %v2512 = vunpack.c.h.b16 %v2017
    %v2513 = vunpack.c.l.b16 %v2018
    %v2514 = vunpack.c.h.b16 %v2018
    %v2515 = vunpack.c.l.b16 %v2019
    %v2516 = vunpack.c.l.b16 %v2020
    %v2517 = vunpack.c.h.b16 %v2020
    %v2518 = vunpack.c.l.b16 %v2021
    %v2519 = vunpack.c.h.b16 %v2021
    %v2520 = vunpack.c.l.b16 %v2022
    %v2521 = vunpack.c.l.b16 %v2023
    %v2522 = vunpack.c.h.b16 %v2023
    %v2523 = vunpack.c.l.b16 %v2024
    %v2524 = vunpack.c.h.b16 %v2024
    %v2525 = vunpack.c.l.b16 %v2025
    %v2526 = vunpack.c.l.b16 %v2026
    %v2527 = vunpack.c.h.b16 %v2026
    %v2528 = vunpack.c.l.b16 %v2027
    %v2529 = vunpack.c.h.b16 %v2027
    %v2530 = vunpack.c.l.b16 %v2028
    %v2531 = vunpack.c.l.b16 %v2029
    %v2532 = vunpack.c.h.b16 %v2029
    %v2533 = vunpack.c.l.b16 %v2030
    %v2534 = vunpack.c.h.b16 %v2030
    %v2535 = vunpack.c.l.b16 %v2031
    %v2536 = vunpack.c.l.b16 %v2032
    %v2537 = vunpack.c.h.b16 %v2032
    %v2538 = vunpack.c.l.b16 %v2033
    %v2539 = vunpack.c.h.b16 %v2033
    %v2540 = vunpack.c.l.b16 %v2034
    %v2541 = vunpack.c.l.b16 %v2035
    %v2542 = vunpack.c.h.b16 %v2035
    %v2543 = vunpack.c.l.b16 %v2036
    %v2544 = vunpack.c.h.b16 %v2036
    %v2545 = vunpack.c.l.b16 %v2037
    %v2546 = vunpack.c.l.b16 %v2038
    %v2547 = vunpack.c.h.b16 %v2038
    %v2548 = vunpack.c.l.b16 %v2039
    %v2549 = vunpack.c.h.b16 %v2039
    %v2550 = vunpack.c.l.b16 %v2040
    %v2551 = vunpack.c.l.b16 %v2041
    %v2552 = vunpack.c.h.b16 %v2041
    %v2553 = vunpack.c.l.b16 %v2042
    %v2554 = vunpack.c.h.b16 %v2042
    %v2555 = vunpack.c.l.b16 %v2043
    %v2556 = vunpack.c.l.b16 %v2044
    %v2557 = vunpack.c.h.b16 %v2044
    %v2558 = vunpack.c.l.b16 %v2045
    %v2559 = vunpack.c.h.b16 %v2045
    %v2560 = vunpack.c.l.b16 %v2046
    %v2561 = vunpack.c.l.b16 %v2047
    %v2562 = vunpack.c.h.b16 %v2047
    %v2563 = vunpack.c.l.b16 %v2048
    %v2564 = vunpack.c.h.b16 %v2048
    %v2565 = vunpack.c.l.b16 %v2049
    %v2566 = vunpack.c.l.b16 %v2050
    %v2567 = vunpack.c.h.b16 %v2050
    %v2568 = vunpack.c.l.b16 %v2051
    %v2569 = vunpack.c.h.b16 %v2051
    %v2570 = vunpack.c.l.b16 %v2052
    %v2571 = vunpack.c.l.b16 %v2053
    %v2572 = vunpack.c.h.b16 %v2053
    %v2573 = vunpack.c.l.b16 %v2054
    %v2574 = vunpack.c.h.b16 %v2054
    %v2575 = vunpack.c.l.b16 %v2055
    %v2576 = vunpack.c.l.b16 %v2056
    %v2577 = vunpack.c.h.b16 %v2056
    %v2578 = vunpack.c.l.b16 %v2057
    %v2579 = vunpack.c.h.b16 %v2057
    %v2580 = vunpack.c.l.b16 %v2058
    %v2581 = vunpack.c.l.b16 %v2059
    %v2582 = vunpack.c.h.b16 %v2059
    %v2583 = vunpack.c.l.b16 %v2060
    %v2584 = vunpack.c.h.b16 %v2060
    %v2585 = vunpack.c.l.b16 %v2061
    %v2586 = vpack.c.b16 %v2271, %v2266
    %v2587 = vpack.c.b16 %v2272, %v2267
    %v2588 = vpack.c.b16 %v2273, %v2268
    %v2589 = vpack.c.b16 %v2274, %v2269
    %v2590 = vpack.c.b16 %v2275, %v2270
    %v2591 = vpack.c.b16 %v2281, %v2276
    %v2592 = vpack.c.b16 %v2282, %v2277
    %v2593 = vpack.c.b16 %v2283, %v2278
    %v2594 = vpack.c.b16 %v2284, %v2279
    %v2595 = vpack.c.b16 %v2285, %v2280
    %v2596 = vpack.c.b16 %v2291, %v2286
    %v2597 = vpack.c.b16 %v2292, %v2287
    %v2598 = vpack.c.b16 %v2293, %v2288
    %v2599 = vpack.c.b16 %v2294, %v2289
    %v2600 = vpack.c.b16 %v2295, %v2290
    %v2601 = vpack.c.b16 %v2301, %v2296
    %v2602 = vpack.c.b16 %v2302, %v2297
    %v2603 = vpack.c.b16 %v2303, %v2298
    %v2604 = vpack.c.b16 %v2304, %v2299
    %v2605 = vpack.c.b16 %v2305, %v2300
    %v2606 = vpack.c.b16 %v2311, %v2306
    %v2607 = vpack.c.b16 %v2312, %v2307
    %v2608 = vpack.c.b16 %v2313, %v2308
    %v2609 = vpack.c.b16 %v2314, %v2309
    %v2610 = vpack.c.b16 %v2315, %v2310
    %v2611 = vpack.c.b16 %v2321, %v2316
    %v2612 = vpack.c.b16 %v2322, %v2317
    %v2613 = vpack.c.b16 %v2323, %v2318
    %v2614 = vpack.c.b16 %v2324, %v2319
    %v2615 = vpack.c.b16 %v2325, %v2320
    %v2616 = vpack.c.b16 %v2331, %v2326
    %v2617 = vpack.c.b16 %v2332, %v2327
    %v2618 = vpack.c.b16 %v2333, %v2328
    %v2619 = vpack.c.b16 %v2334, %v2329
    %v2620 = vpack.c.b16 %v2335, %v2330
    %v2621 = vpack.c.b16 %v2341, %v2336
    %v2622 = vpack.c.b16 %v2342, %v2337
    %v2623 = vpack.c.b16 %v2343, %v2338
    %v2624 = vpack.c.b16 %v2344, %v2339
    %v2625 = vpack.c.b16 %v2345, %v2340
    %v2626 = vpack.c.b16 %v2351, %v2346
    %v2627 = vpack.c.b16 %v2352, %v2347
    %v2628 = vpack.c.b16 %v2353, %v2348
    %v2629 = vpack.c.b16 %v2354, %v2349
    %v2630 = vpack.c.b16 %v2355, %v2350
    %v2631 = vpack.c.b16 %v2361, %v2356
    %v2632 = vpack.c.b16 %v2362, %v2357
    %v2633 = vpack.c.b16 %v2363, %v2358
    %v2634 = vpack.c.b16 %v2364, %v2359
    %v2635 = vpack.c.b16 %v2365, %v2360
    %v2636 = vpack.c.b16 %v2371, %v2366
    %v2637 = vpack.c.b16 %v2372, %v2367
    %v2638 = vpack.c.b16 %v2373, %v2368
    %v2639 = vpack.c.b16 %v2374, %v2369
    %v2640 = vpack.c.b16 %v2375, %v2370
    %v2641 = vpack.c.b16 %v2381, %v2376
    %v2642 = vpack.c.b16 %v2382, %v2377
    %v2643 = vpack.c.b16 %v2383, %v2378
    %v2644 = vpack.c.b16 %v2384, %v2379
    %v2645 = vpack.c.b16 %v2385, %v2380
    %v2646 = vpack.c.b16 %v2391, %v2386
    %v2647 = vpack.c.b16 %v2392, %v2387
    %v2648 = vpack.c.b16 %v2393, %v2388
    %v2649 = vpack.c.b16 %v2394, %v2389
    %v2650 = vpack.c.b16 %v2395, %v2390
    %v2651 = vpack.c.b16 %v2401, %v2396
    %v2652 = vpack.c.b16 %v2402, %v2397
    %v2653 = vpack.c.b16 %v2403, %v2398
    %v2654 = vpack.c.b16 %v2404, %v2399
    %v2655 = vpack.c.b16 %v2405, %v2400
    %v2656 = vpack.c.b16 %v2411, %v2406
    %v2657 = vpack.c.b16 %v2412, %v2407
    %v2658 = vpack.c.b16 %v2413, %v2408
    %v2659 = vpack.c.b16 %v2414, %v2409
    %v2660 = vpack.c.b16 %v2415, %v2410
    %v2661 = vpack.c.b16 %v2421, %v2416
    %v2662 = vpack.c.b16 %v2422, %v2417
    %v2663 = vpack.c.b16 %v2423, %v2418
    %v2664 = vpack.c.b16 %v2424, %v2419
    %v2665 = vpack.c.b16 %v2425, %v2420
    %v2666 = vpack.c.b16 %v2431, %v2426
    %v2667 = vpack.c.b16 %v2432, %v2427
    %v2668 = vpack.c.b16 %v2433, %v2428
    %v2669 = vpack.c.b16 %v2434, %v2429
    %v2670 = vpack.c.b16 %v2435, %v2430
    %v2671 = vpack.c.b16 %v2441, %v2436
    %v2672 = vpack.c.b16 %v2442, %v2437
    %v2673 = vpack.c.b16 %v2443, %v2438
    %v2674 = vpack.c.b16 %v2444, %v2439
    %v2675 = vpack.c.b16 %v2445, %v2440
    %v2676 = vpack.c.b16 %v2451, %v2446
    %v2677 = vpack.c.b16 %v2452, %v2447
    %v2678 = vpack.c.b16 %v2453, %v2448
    %v2679 = vpack.c.b16 %v2454, %v2449
    %v2680 = vpack.c.b16 %v2455, %v2450
    %v2681 = vpack.c.b16 %v2461, %v2456
    %v2682 = vpack.c.b16 %v2462, %v2457
    %v2683 = vpack.c.b16 %v2463, %v2458
    %v2684 = vpack.c.b16 %v2464, %v2459
    %v2685 = vpack.c.b16 %v2465, %v2460
    %v2686 = vpack.c.b16 %v2471, %v2466
    %v2687 = vpack.c.b16 %v2472, %v2467
    %v2688 = vpack.c.b16 %v2473, %v2468
    %v2689 = vpack.c.b16 %v2474, %v2469
    %v2690 = vpack.c.b16 %v2475, %v2470
    %v2691 = vpack.c.b16 %v2481, %v2476
    %v2692 = vpack.c.b16 %v2482, %v2477
    %v2693 = vpack.c.b16 %v2483, %v2478
    %v2694 = vpack.c.b16 %v2484, %v2479
    %v2695 = vpack.c.b16 %v2485, %v2480
    %v2696 = vpack.c.b16 %v2491, %v2486
    %v2697 = vpack.c.b16 %v2492, %v2487
    %v2698 = vpack.c.b16 %v2493, %v2488
    %v2699 = vpack.c.b16 %v2494, %v2489
    %v2700 = vpack.c.b16 %v2495, %v2490
    %v2701 = vpack.c.b16 %v2501, %v2496
    %v2702 = vpack.c.b16 %v2502, %v2497
    %v2703 = vpack.c.b16 %v2503, %v2498
    %v2704 = vpack.c.b16 %v2504, %v2499
    %v2705 = vpack.c.b16 %v2505, %v2500
    %v2706 = vpack.c.b16 %v2511, %v2506
    %v2707 = vpack.c.b16 %v2512, %v2507
    %v2708 = vpack.c.b16 %v2513, %v2508
    %v2709 = vpack.c.b16 %v2514, %v2509
    %v2710 = vpack.c.b16 %v2515, %v2510
    %v2711 = vpack.c.b16 %v2521, %v2516
    %v2712 = vpack.c.b16 %v2522, %v2517
    %v2713 = vpack.c.b16 %v2523, %v2518
    %v2714 = vpack.c.b16 %v2524, %v2519
    %v2715 = vpack.c.b16 %v2525, %v2520
    %v2716 = vpack.c.b16 %v2531, %v2526
    %v2717 = vpack.c.b16 %v2532, %v2527
    %v2718 = vpack.c.b16 %v2533, %v2528
    %v2719 = vpack.c.b16 %v2534, %v2529
    %v2720 = vpack.c.b16 %v2535, %v2530
    %v2721 = vpack.c.b16 %v2541, %v2536
    %v2722 = vpack.c.b16 %v2542, %v2537
    %v2723 = vpack.c.b16 %v2543, %v2538
    %v2724 = vpack.c.b16 %v2544, %v2539
    %v2725 = vpack.c.b16 %v2545, %v2540
    %v2726 = vpack.c.b16 %v2551, %v2546
    %v2727 = vpack.c.b16 %v2552, %v2547
    %v2728 = vpack.c.b16 %v2553, %v2548
    %v2729 = vpack.c.b16 %v2554, %v2549
    %v2730 = vpack.c.b16 %v2555, %v2550
    %v2731 = vpack.c.b16 %v2561, %v2556
    %v2732 = vpack.c.b16 %v2562, %v2557
    %v2733 = vpack.c.b16 %v2563, %v2558
    %v2734 = vpack.c.b16 %v2564, %v2559
    %v2735 = vpack.c.b16 %v2565, %v2560
    %v2736 = vpack.c.b16 %v2571, %v2566
    %v2737 = vpack.c.b16 %v2572, %v2567
    %v2738 = vpack.c.b16 %v2573, %v2568
    %v2739 = vpack.c.b16 %v2574, %v2569
    %v2740 = vpack.c.b16 %v2575, %v2570
    %v2741 = vpack.c.b16 %v2581, %v2576
    %v2742 = vpack.c.b16 %v2582, %v2577
    %v2743 = vpack.c.b16 %v2583, %v2578
    %v2744 = vpack.c.b16 %v2584, %v2579
    %v2745 = vpack.c.b16 %v2585, %v2580
    %2906 = vmatpush.bf16.msra.mxu0 %v2621
    %2907 = vmatpush.bf16.msra.mxu0 %v2616
    %2908 = vmatpush.bf16.msra.mxu0 %v2611
    %2909 = vmatpush.bf16.msra.mxu0 %v2606
    %2910 = vmatpush.bf16.msra.mxu0 %v2601
    %2911 = vmatpush.bf16.msra.mxu0 %v2596
    %2912 = vmatpush.bf16.msra.mxu0 %v2591
    %2913 = vmatpush.bf16.msra.mxu0 %v2586
    %2914 = vmatmul.bf16.gmra.mxu0 %v1866
    %v2915 = vpop.f32.mrf.mxu0
    %v2916 = vadd.f32 %v2064, %v2915
    %v2917 = vpop.f32.mrf.mxu0
    %2918 = vdwg.mxu0
    %2919 = vmatpush.bf16.msra.mxu0 %v2661
    %2920 = vmatpush.bf16.msra.mxu0 %v2656
    %2921 = vmatpush.bf16.msra.mxu0 %v2651
    %2922 = vmatpush.bf16.msra.mxu0 %v2646
    %2923 = vmatpush.bf16.msra.mxu0 %v2641
    %2924 = vmatpush.bf16.msra.mxu0 %v2636
    %2925 = vmatpush.bf16.msra.mxu0 %v2631
    %2926 = vmatpush.bf16.msra.mxu0 %v2626
    %2927 = vmatmul.bf16.gmra.mxu0 %v1867
    %v2928 = vpop.f32.mrf.mxu0
    %v2929 = vadd.f32 %v2916, %v2928
    %v2930 = vpop.f32.mrf.mxu0
    %2931 = vdwg.mxu0
    %2932 = vmatpush.bf16.msra.mxu0 %v2701
    %2933 = vmatpush.bf16.msra.mxu0 %v2696
    %2934 = vmatpush.bf16.msra.mxu0 %v2691
    %2935 = vmatpush.bf16.msra.mxu0 %v2686
    %2936 = vmatpush.bf16.msra.mxu0 %v2681
    %2937 = vmatpush.bf16.msra.mxu0 %v2676
    %2938 = vmatpush.bf16.msra.mxu0 %v2671
    %2939 = vmatpush.bf16.msra.mxu0 %v2666
    %2940 = vmatmul.bf16.gmra.mxu0 %v1868
    %v2941 = vpop.f32.mrf.mxu0
    %v2942 = vadd.f32 %v2929, %v2941
    %v2943 = vpop.f32.mrf.mxu0
    %2944 = vdwg.mxu0
    %2945 = vmatpush.bf16.msra.mxu0 %v2741
    %2946 = vmatpush.bf16.msra.mxu0 %v2736
    %2947 = vmatpush.bf16.msra.mxu0 %v2731
    %2948 = vmatpush.bf16.msra.mxu0 %v2726
    %2949 = vmatpush.bf16.msra.mxu0 %v2721
    %2950 = vmatpush.bf16.msra.mxu0 %v2716
    %2951 = vmatpush.bf16.msra.mxu0 %v2711
    %2952 = vmatpush.bf16.msra.mxu0 %v2706
    %2953 = vmatmul.bf16.gmra.mxu0 %v1869
    %v2954 = vpop.f32.mrf.mxu0
    %v2955 = vadd.f32 %v2942, %v2954
    %v2956 = vpop.f32.mrf.mxu0
    %2957 = vdwg.mxu0
    %2958 = vmatpush.bf16.msra.mxu0 %v2622
    %2959 = vmatpush.bf16.msra.mxu0 %v2617
    %2960 = vmatpush.bf16.msra.mxu0 %v2612
    %2961 = vmatpush.bf16.msra.mxu0 %v2607
    %2962 = vmatpush.bf16.msra.mxu0 %v2602
    %2963 = vmatpush.bf16.msra.mxu0 %v2597
    %2964 = vmatpush.bf16.msra.mxu0 %v2592
    %2965 = vmatpush.bf16.msra.mxu0 %v2587
    %2966 = vmatmul.bf16.gmra.mxu0 %v1866
    %v2967 = vpop.f32.mrf.mxu0
    %v2968 = vadd.f32 %v2065, %v2967
    %v2969 = vpop.f32.mrf.mxu0
    %2970 = vdwg.mxu0
    %2971 = vmatpush.bf16.msra.mxu0 %v2662
    %2972 = vmatpush.bf16.msra.mxu0 %v2657
    %2973 = vmatpush.bf16.msra.mxu0 %v2652
    %2974 = vmatpush.bf16.msra.mxu0 %v2647
    %2975 = vmatpush.bf16.msra.mxu0 %v2642
    %2976 = vmatpush.bf16.msra.mxu0 %v2637
    %2977 = vmatpush.bf16.msra.mxu0 %v2632
    %2978 = vmatpush.bf16.msra.mxu0 %v2627
    %2979 = vmatmul.bf16.gmra.mxu0 %v1867
    %v2980 = vpop.f32.mrf.mxu0
    %v2981 = vadd.f32 %v2968, %v2980
    %v2982 = vpop.f32.mrf.mxu0
    %2983 = vdwg.mxu0
    %2984 = vmatpush.bf16.msra.mxu0 %v2702
    %2985 = vmatpush.bf16.msra.mxu0 %v2697
    %2986 = vmatpush.bf16.msra.mxu0 %v2692
    %2987 = vmatpush.bf16.msra.mxu0 %v2687
    %2988 = vmatpush.bf16.msra.mxu0 %v2682
    %2989 = vmatpush.bf16.msra.mxu0 %v2677
    %2990 = vmatpush.bf16.msra.mxu0 %v2672
    %2991 = vmatpush.bf16.msra.mxu0 %v2667
    %2992 = vmatmul.bf16.gmra.mxu0 %v1868
    %v2993 = vpop.f32.mrf.mxu0
    %v2994 = vadd.f32 %v2981, %v2993
    %v2995 = vpop.f32.mrf.mxu0
    %2996 = vdwg.mxu0
    %2997 = vmatpush.bf16.msra.mxu0 %v2742
    %2998 = vmatpush.bf16.msra.mxu0 %v2737
    %2999 = vmatpush.bf16.msra.mxu0 %v2732
    %3000 = vmatpush.bf16.msra.mxu0 %v2727
    %3001 = vmatpush.bf16.msra.mxu0 %v2722
    %3002 = vmatpush.bf16.msra.mxu0 %v2717
    %3003 = vmatpush.bf16.msra.mxu0 %v2712
    %3004 = vmatpush.bf16.msra.mxu0 %v2707
    %3005 = vmatmul.bf16.gmra.mxu0 %v1869
    %v3006 = vpop.f32.mrf.mxu0
    %v3007 = vadd.f32 %v2994, %v3006
    %v3008 = vpop.f32.mrf.mxu0
    %3009 = vdwg.mxu0
    %3010 = vmatpush.bf16.msra.mxu0 %v2623
    %3011 = vmatpush.bf16.msra.mxu0 %v2618
    %3012 = vmatpush.bf16.msra.mxu0 %v2613
    %3013 = vmatpush.bf16.msra.mxu0 %v2608
    %3014 = vmatpush.bf16.msra.mxu0 %v2603
    %3015 = vmatpush.bf16.msra.mxu0 %v2598
    %3016 = vmatpush.bf16.msra.mxu0 %v2593
    %3017 = vmatpush.bf16.msra.mxu0 %v2588
    %3018 = vmatmul.bf16.gmra.mxu0 %v1866
    %v3019 = vpop.f32.mrf.mxu0
    %v3020 = vadd.f32 %v2066, %v3019
    %v3021 = vpop.f32.mrf.mxu0
    %3022 = vdwg.mxu0
    %3023 = vmatpush.bf16.msra.mxu0 %v2663
    %3024 = vmatpush.bf16.msra.mxu0 %v2658
    %3025 = vmatpush.bf16.msra.mxu0 %v2653
    %3026 = vmatpush.bf16.msra.mxu0 %v2648
    %3027 = vmatpush.bf16.msra.mxu0 %v2643
    %3028 = vmatpush.bf16.msra.mxu0 %v2638
    %3029 = vmatpush.bf16.msra.mxu0 %v2633
    %3030 = vmatpush.bf16.msra.mxu0 %v2628
    %3031 = vmatmul.bf16.gmra.mxu0 %v1867
    %v3032 = vpop.f32.mrf.mxu0
    %v3033 = vadd.f32 %v3020, %v3032
    %v3034 = vpop.f32.mrf.mxu0
    %3035 = vdwg.mxu0
    %3036 = vmatpush.bf16.msra.mxu0 %v2703
    %3037 = vmatpush.bf16.msra.mxu0 %v2698
    %3038 = vmatpush.bf16.msra.mxu0 %v2693
    %3039 = vmatpush.bf16.msra.mxu0 %v2688
    %3040 = vmatpush.bf16.msra.mxu0 %v2683
    %3041 = vmatpush.bf16.msra.mxu0 %v2678
    %3042 = vmatpush.bf16.msra.mxu0 %v2673
    %3043 = vmatpush.bf16.msra.mxu0 %v2668
    %3044 = vmatmul.bf16.gmra.mxu0 %v1868
    %v3045 = vpop.f32.mrf.mxu0
    %v3046 = vadd.f32 %v3033, %v3045
    %v3047 = vpop.f32.mrf.mxu0
    %3048 = vdwg.mxu0
    %3049 = vmatpush.bf16.msra.mxu0 %v2743
    %3050 = vmatpush.bf16.msra.mxu0 %v2738
    %3051 = vmatpush.bf16.msra.mxu0 %v2733
    %3052 = vmatpush.bf16.msra.mxu0 %v2728
    %3053 = vmatpush.bf16.msra.mxu0 %v2723
    %3054 = vmatpush.bf16.msra.mxu0 %v2718
    %3055 = vmatpush.bf16.msra.mxu0 %v2713
    %3056 = vmatpush.bf16.msra.mxu0 %v2708
    %3057 = vmatmul.bf16.gmra.mxu0 %v1869
    %v3058 = vpop.f32.mrf.mxu0
    %v3059 = vadd.f32 %v3046, %v3058
    %v3060 = vpop.f32.mrf.mxu0
    %3061 = vdwg.mxu0
    %3062 = vmatpush.bf16.msra.mxu0 %v2624
    %3063 = vmatpush.bf16.msra.mxu0 %v2619
    %3064 = vmatpush.bf16.msra.mxu0 %v2614
    %3065 = vmatpush.bf16.msra.mxu0 %v2609
    %3066 = vmatpush.bf16.msra.mxu0 %v2604
    %3067 = vmatpush.bf16.msra.mxu0 %v2599
    %3068 = vmatpush.bf16.msra.mxu0 %v2594
    %3069 = vmatpush.bf16.msra.mxu0 %v2589
    %3070 = vmatmul.bf16.gmra.mxu0 %v1866
    %v3071 = vpop.f32.mrf.mxu0
    %v3072 = vadd.f32 %v2067, %v3071
    %v3073 = vpop.f32.mrf.mxu0
    %3074 = vdwg.mxu0
    %3075 = vmatpush.bf16.msra.mxu0 %v2664
    %3076 = vmatpush.bf16.msra.mxu0 %v2659
    %3077 = vmatpush.bf16.msra.mxu0 %v2654
    %3078 = vmatpush.bf16.msra.mxu0 %v2649
    %3079 = vmatpush.bf16.msra.mxu0 %v2644
    %3080 = vmatpush.bf16.msra.mxu0 %v2639
    %3081 = vmatpush.bf16.msra.mxu0 %v2634
    %3082 = vmatpush.bf16.msra.mxu0 %v2629
    %3083 = vmatmul.bf16.gmra.mxu0 %v1867
    %v3084 = vpop.f32.mrf.mxu0
    %v3085 = vadd.f32 %v3072, %v3084
    %v3086 = vpop.f32.mrf.mxu0
    %3087 = vdwg.mxu0
    %3088 = vmatpush.bf16.msra.mxu0 %v2704
    %3089 = vmatpush.bf16.msra.mxu0 %v2699
    %3090 = vmatpush.bf16.msra.mxu0 %v2694
    %3091 = vmatpush.bf16.msra.mxu0 %v2689
    %3092 = vmatpush.bf16.msra.mxu0 %v2684
    %3093 = vmatpush.bf16.msra.mxu0 %v2679
    %3094 = vmatpush.bf16.msra.mxu0 %v2674
    %3095 = vmatpush.bf16.msra.mxu0 %v2669
    %3096 = vmatmul.bf16.gmra.mxu0 %v1868
    %v3097 = vpop.f32.mrf.mxu0
    %v3098 = vadd.f32 %v3085, %v3097
    %v3099 = vpop.f32.mrf.mxu0
    %3100 = vdwg.mxu0
    %3101 = vmatpush.bf16.msra.mxu0 %v2744
    %3102 = vmatpush.bf16.msra.mxu0 %v2739
    %3103 = vmatpush.bf16.msra.mxu0 %v2734
    %3104 = vmatpush.bf16.msra.mxu0 %v2729
    %3105 = vmatpush.bf16.msra.mxu0 %v2724
    %3106 = vmatpush.bf16.msra.mxu0 %v2719
    %3107 = vmatpush.bf16.msra.mxu0 %v2714
    %3108 = vmatpush.bf16.msra.mxu0 %v2709
    %3109 = vmatmul.bf16.gmra.mxu0 %v1869
    %v3110 = vpop.f32.mrf.mxu0
    %v3111 = vadd.f32 %v3098, %v3110
    %v3112 = vpop.f32.mrf.mxu0
    %3113 = vdwg.mxu0
    %3114 = vmatpush.bf16.msra.mxu0 %v2625
    %3115 = vmatpush.bf16.msra.mxu0 %v2620
    %3116 = vmatpush.bf16.msra.mxu0 %v2615
    %3117 = vmatpush.bf16.msra.mxu0 %v2610
    %3118 = vmatpush.bf16.msra.mxu0 %v2605
    %3119 = vmatpush.bf16.msra.mxu0 %v2600
    %3120 = vmatpush.bf16.msra.mxu0 %v2595
    %3121 = vmatpush.bf16.msra.mxu0 %v2590
    %3122 = vmatmul.bf16.gmra.mxu0 %v1866
    %v3123 = vpop.f32.mrf.mxu0
    %v3124 = vadd.f32 %v2068, %v3123
    %v3125 = vpop.f32.mrf.mxu0
    %3126 = vdwg.mxu0
    %3127 = vmatpush.bf16.msra.mxu0 %v2665
    %3128 = vmatpush.bf16.msra.mxu0 %v2660
    %3129 = vmatpush.bf16.msra.mxu0 %v2655
    %3130 = vmatpush.bf16.msra.mxu0 %v2650
    %3131 = vmatpush.bf16.msra.mxu0 %v2645
    %3132 = vmatpush.bf16.msra.mxu0 %v2640
    %3133 = vmatpush.bf16.msra.mxu0 %v2635
    %3134 = vmatpush.bf16.msra.mxu0 %v2630
    %3135 = vmatmul.bf16.gmra.mxu0 %v1867
    %v3136 = vpop.f32.mrf.mxu0
    %v3137 = vadd.f32 %v3124, %v3136
    %v3138 = vpop.f32.mrf.mxu0
    %3139 = vdwg.mxu0
    %3140 = vmatpush.bf16.msra.mxu0 %v2705
    %3141 = vmatpush.bf16.msra.mxu0 %v2700
    %3142 = vmatpush.bf16.msra.mxu0 %v2695
    %3143 = vmatpush.bf16.msra.mxu0 %v2690
    %3144 = vmatpush.bf16.msra.mxu0 %v2685
    %3145 = vmatpush.bf16.msra.mxu0 %v2680
    %3146 = vmatpush.bf16.msra.mxu0 %v2675
    %3147 = vmatpush.bf16.msra.mxu0 %v2670
    %3148 = vmatmul.bf16.gmra.mxu0 %v1868
    %v3149 = vpop.f32.mrf.mxu0
    %v3150 = vadd.f32 %v3137, %v3149
    %v3151 = vpop.f32.mrf.mxu0
    %3152 = vdwg.mxu0
    %3153 = vmatpush.bf16.msra.mxu0 %v2745
    %3154 = vmatpush.bf16.msra.mxu0 %v2740
    %3155 = vmatpush.bf16.msra.mxu0 %v2735
    %3156 = vmatpush.bf16.msra.mxu0 %v2730
    %3157 = vmatpush.bf16.msra.mxu0 %v2725
    %3158 = vmatpush.bf16.msra.mxu0 %v2720
    %3159 = vmatpush.bf16.msra.mxu0 %v2715
    %3160 = vmatpush.bf16.msra.mxu0 %v2710
    %3161 = vmatmul.bf16.gmra.mxu0 %v1869
    %v3162 = vpop.f32.mrf.mxu0
    %v3163 = vadd.f32 %v3150, %v3162
    %v3164 = vpop.f32.mrf.mxu0
    %3165 = vdwg.mxu0
    %v3166 = vmax.f32 %v2955, 0.0
    %v3167 = vmax.f32 %v3007, 0.0
    %v3168 = vmax.f32 %v3059, 0.0
    %v3169 = vmax.f32 %v3111, 0.0
    %v3170 = vmax.f32 %v3163, 0.0
    %v3171 = vpack.c.bf16 %v3166, %v3166
    %v3172 = vpack.c.bf16 %v3167, %v3167
    %v3173 = vpack.c.bf16 %v3168, %v3168
    %v3174 = vpack.c.bf16 %v3169, %v3169
    %v3175 = vpack.c.bf16 %v3170, %v3170
    %v3176 = vld [vmem:[#allocation11] sm:$0xf]
    %v3177 = vld [vmem:[#allocation11 + $0x4] sm:$0xf]
    %v3178 = vld [vmem:[#allocation11 + $0x8] sm:$0xf]
    %v3179 = vld [vmem:[#allocation11 + $0xc] sm:$0xf]
    %v3180 = vld [vmem:[#allocation11 + $0x10] sm:$0xf]
    %v3181 = vld [vmem:[#allocation11 + $0x14] sm:$0xf]
    %v3182 = vld [vmem:[#allocation11 + $0x18] sm:$0xf]
    %v3183 = vld [vmem:[#allocation11 + $0x1c] sm:$0xf]
    %v3184 = vld [vmem:[#allocation11 + $0x20] sm:$0xf]
    %v3185 = vld [vmem:[#allocation11 + $0x24] sm:$0xf]
    %v3186 = vld [vmem:[#allocation11 + $0x28] sm:$0xf]
    %v3187 = vld [vmem:[#allocation11 + $0x2c] sm:$0xf]
    %v3188 = vld [vmem:[#allocation11 + $0x30] sm:$0xf]
    %v3189 = vld [vmem:[#allocation11 + $0x34] sm:$0xf]
    %v3190 = vld [vmem:[#allocation11 + $0x38] sm:$0xf]
    %v3191 = vld [vmem:[#allocation11 + $0x3c] sm:$0xf]
    %v3192 = vld [vmem:[#allocation11 + $0x40] sm:$0xf]
    %v3193 = vld [vmem:[#allocation11 + $0x44] sm:$0xf]
    %v3194 = vld [vmem:[#allocation11 + $0x48] sm:$0xf]
    %v3195 = vld [vmem:[#allocation11 + $0x4c] sm:$0xf]
    %v3196 = vld [vmem:[#allocation11 + $0x50] sm:$0xf]
    %v3197 = vld [vmem:[#allocation11 + $0x54] sm:$0xf]
    %v3198 = vld [vmem:[#allocation11 + $0x58] sm:$0xf]
    %v3199 = vld [vmem:[#allocation11 + $0x5c] sm:$0xf]
    %v3200 = vld [vmem:[#allocation11 + $0x60] sm:$0xf]
    %v3201 = vld [vmem:[#allocation11 + $0x64] sm:$0xf]
    %v3202 = vld [vmem:[#allocation11 + $0x68] sm:$0xf]
    %v3203 = vld [vmem:[#allocation11 + $0x6c] sm:$0xf]
    %v3204 = vld [vmem:[#allocation11 + $0x70] sm:$0xf]
    %v3205 = vld [vmem:[#allocation11 + $0x74] sm:$0xf]
    %v3206 = vld [vmem:[#allocation11 + $0x78] sm:$0xf]
    %v3207 = vld [vmem:[#allocation11 + $0x7c] sm:$0xf]
    %v3208 = vld [vmem:[#allocation11 + $0x80] sm:$0xf]
    %v3209 = vld [vmem:[#allocation11 + $0x84] sm:$0xf]
    %v3210 = vld [vmem:[#allocation11 + $0x88] sm:$0xf]
    %v3211 = vld [vmem:[#allocation11 + $0x8c] sm:$0xf]
    %v3212 = vld [vmem:[#allocation11 + $0x90] sm:$0xf]
    %v3213 = vld [vmem:[#allocation11 + $0x94] sm:$0xf]
    %v3214 = vld [vmem:[#allocation11 + $0x98] sm:$0xf]
    %v3215 = vld [vmem:[#allocation11 + $0x9c] sm:$0xf]
    %v3216 = vld [vmem:[#allocation11 + $0xa0] sm:$0xf]
    %v3217 = vld [vmem:[#allocation11 + $0xa4] sm:$0xf]
    %v3218 = vld [vmem:[#allocation11 + $0xa8] sm:$0xf]
    %v3219 = vld [vmem:[#allocation11 + $0xac] sm:$0xf]
    %v3220 = vld [vmem:[#allocation11 + $0xb0] sm:$0xf]
    %v3221 = vld [vmem:[#allocation11 + $0xb4] sm:$0xf]
    %v3222 = vld [vmem:[#allocation11 + $0xb8] sm:$0xf]
    %v3223 = vld [vmem:[#allocation11 + $0xbc] sm:$0xf]
    %v3224 = vld [vmem:[#allocation11 + $0xc0] sm:$0xf]
    %v3225 = vld [vmem:[#allocation11 + $0xc4] sm:$0xf]
    %v3226 = vld [vmem:[#allocation11 + $0xc8] sm:$0xf]
    %v3227 = vld [vmem:[#allocation11 + $0xcc] sm:$0xf]
    %v3228 = vld [vmem:[#allocation11 + $0xd0] sm:$0xf]
    %v3229 = vld [vmem:[#allocation11 + $0xd4] sm:$0xf]
    %v3230 = vld [vmem:[#allocation11 + $0xd8] sm:$0xf]
    %v3231 = vld [vmem:[#allocation11 + $0xdc] sm:$0xf]
    %v3232 = vld [vmem:[#allocation11 + $0xe0] sm:$0xf]
    %v3233 = vld [vmem:[#allocation11 + $0xe4] sm:$0xf]
    %v3234 = vld [vmem:[#allocation11 + $0xe8] sm:$0xf]
    %v3235 = vld [vmem:[#allocation11 + $0xec] sm:$0xf]
    %v3236 = vld [vmem:[#allocation11 + $0xf0] sm:$0xf]
    %v3237 = vld [vmem:[#allocation11 + $0xf4] sm:$0xf]
    %v3238 = vld [vmem:[#allocation11 + $0xf8] sm:$0xf]
    %v3239 = vld [vmem:[#allocation11 + $0xfc] sm:$0xf]
    %v3240 = vld [vmem:[#allocation11 + $0x100] sm:$0xf]
    %v3241 = vld [vmem:[#allocation11 + $0x104] sm:$0xf]
    %v3242 = vld [vmem:[#allocation11 + $0x108] sm:$0xf]
    %v3243 = vld [vmem:[#allocation11 + $0x10c] sm:$0xf]
    %v3244 = vld [vmem:[#allocation11 + $0x110] sm:$0xf]
    %v3245 = vld [vmem:[#allocation11 + $0x114] sm:$0xf]
    %v3246 = vld [vmem:[#allocation11 + $0x118] sm:$0xf]
    %v3247 = vld [vmem:[#allocation11 + $0x11c] sm:$0xf]
    %v3248 = vld [vmem:[#allocation11 + $0x120] sm:$0xf]
    %v3249 = vld [vmem:[#allocation11 + $0x124] sm:$0xf]
    %v3250 = vld [vmem:[#allocation11 + $0x128] sm:$0xf]
    %v3251 = vld [vmem:[#allocation11 + $0x12c] sm:$0xf]
    %v3252 = vld [vmem:[#allocation11 + $0x130] sm:$0xf]
    %v3253 = vld [vmem:[#allocation11 + $0x134] sm:$0xf]
    %v3254 = vld [vmem:[#allocation11 + $0x138] sm:$0xf]
    %v3255 = vld [vmem:[#allocation11 + $0x13c] sm:$0xf]
    %v3256 = vld [vmem:[%s6] sm:$0x1]
    %v3258 = vperm.slane %v3256, 0
    %v3340 = vunpack.c.l.b16 %v3176
    %v3341 = vunpack.c.l.b16 %v3177
    %v3342 = vunpack.c.l.b16 %v3178
    %v3343 = vunpack.c.l.b16 %v3179
    %v3344 = vunpack.c.l.b16 %v3180
    %v3345 = vunpack.c.l.b16 %v3181
    %v3346 = vunpack.c.l.b16 %v3182
    %v3347 = vunpack.c.l.b16 %v3183
    %v3348 = vunpack.c.l.b16 %v3184
    %v3349 = vunpack.c.l.b16 %v3185
    %v3350 = vunpack.c.l.b16 %v3186
    %v3351 = vunpack.c.l.b16 %v3187
    %v3352 = vunpack.c.l.b16 %v3188
    %v3353 = vunpack.c.l.b16 %v3189
    %v3354 = vunpack.c.l.b16 %v3190
    %v3355 = vunpack.c.l.b16 %v3191
    %v3356 = vunpack.c.l.b16 %v3192
    %v3357 = vunpack.c.l.b16 %v3193
    %v3358 = vunpack.c.l.b16 %v3194
    %v3359 = vunpack.c.l.b16 %v3195
    %v3360 = vunpack.c.l.b16 %v3196
    %v3361 = vunpack.c.l.b16 %v3197
    %v3362 = vunpack.c.l.b16 %v3198
    %v3363 = vunpack.c.l.b16 %v3199
    %v3364 = vunpack.c.l.b16 %v3200
    %v3365 = vunpack.c.l.b16 %v3201
    %v3366 = vunpack.c.l.b16 %v3202
    %v3367 = vunpack.c.l.b16 %v3203
    %v3368 = vunpack.c.l.b16 %v3204
    %v3369 = vunpack.c.l.b16 %v3205
    %v3370 = vunpack.c.l.b16 %v3206
    %v3371 = vunpack.c.l.b16 %v3207
    %v3372 = vunpack.c.l.b16 %v3208
    %v3373 = vunpack.c.l.b16 %v3209
    %v3374 = vunpack.c.l.b16 %v3210
    %v3375 = vunpack.c.l.b16 %v3211
    %v3376 = vunpack.c.l.b16 %v3212
    %v3377 = vunpack.c.l.b16 %v3213
    %v3378 = vunpack.c.l.b16 %v3214
    %v3379 = vunpack.c.l.b16 %v3215
    %v3380 = vunpack.c.l.b16 %v3216
    %v3381 = vunpack.c.l.b16 %v3217
    %v3382 = vunpack.c.l.b16 %v3218
    %v3383 = vunpack.c.l.b16 %v3219
    %v3384 = vunpack.c.l.b16 %v3220
    %v3385 = vunpack.c.l.b16 %v3221
    %v3386 = vunpack.c.l.b16 %v3222
    %v3387 = vunpack.c.l.b16 %v3223
    %v3388 = vunpack.c.l.b16 %v3224
    %v3389 = vunpack.c.l.b16 %v3225
    %v3390 = vunpack.c.l.b16 %v3226
    %v3391 = vunpack.c.l.b16 %v3227
    %v3392 = vunpack.c.l.b16 %v3228
    %v3393 = vunpack.c.l.b16 %v3229
    %v3394 = vunpack.c.l.b16 %v3230
    %v3395 = vunpack.c.l.b16 %v3231
    %v3396 = vunpack.c.l.b16 %v3232
    %v3397 = vunpack.c.l.b16 %v3233
    %v3398 = vunpack.c.l.b16 %v3234
    %v3399 = vunpack.c.l.b16 %v3235
    %v3400 = vunpack.c.l.b16 %v3236
    %v3401 = vunpack.c.l.b16 %v3237
    %v3402 = vunpack.c.l.b16 %v3238
    %v3403 = vunpack.c.l.b16 %v3239
    %v3404 = vunpack.c.l.b16 %v3240
    %v3405 = vunpack.c.l.b16 %v3241
    %v3406 = vunpack.c.l.b16 %v3242
    %v3407 = vunpack.c.l.b16 %v3243
    %v3408 = vunpack.c.l.b16 %v3244
    %v3409 = vunpack.c.l.b16 %v3245
    %v3410 = vunpack.c.l.b16 %v3246
    %v3411 = vunpack.c.l.b16 %v3247
    %v3412 = vunpack.c.l.b16 %v3248
    %v3413 = vunpack.c.l.b16 %v3249
    %v3414 = vunpack.c.l.b16 %v3250
    %v3415 = vunpack.c.l.b16 %v3251
    %v3416 = vunpack.c.l.b16 %v3252
    %v3417 = vunpack.c.l.b16 %v3253
    %v3418 = vunpack.c.l.b16 %v3254
    %v3419 = vunpack.c.l.b16 %v3255
    %v3420 = vpack.c.b16 %v3341, %v3340
    %v3421 = vpack.c.b16 %v3343, %v3342
    %v3422 = vpack.c.b16 %v3345, %v3344
    %v3423 = vpack.c.b16 %v3347, %v3346
    %v3424 = vpack.c.b16 %v3349, %v3348
    %v3425 = vpack.c.b16 %v3351, %v3350
    %v3426 = vpack.c.b16 %v3353, %v3352
    %v3427 = vpack.c.b16 %v3355, %v3354
    %v3428 = vpack.c.b16 %v3357, %v3356
    %v3429 = vpack.c.b16 %v3359, %v3358
    %v3430 = vpack.c.b16 %v3361, %v3360
    %v3431 = vpack.c.b16 %v3363, %v3362
    %v3432 = vpack.c.b16 %v3365, %v3364
    %v3433 = vpack.c.b16 %v3367, %v3366
    %v3434 = vpack.c.b16 %v3369, %v3368
    %v3435 = vpack.c.b16 %v3371, %v3370
    %v3436 = vpack.c.b16 %v3373, %v3372
    %v3437 = vpack.c.b16 %v3375, %v3374
    %v3438 = vpack.c.b16 %v3377, %v3376
    %v3439 = vpack.c.b16 %v3379, %v3378
    %v3440 = vpack.c.b16 %v3381, %v3380
    %v3441 = vpack.c.b16 %v3383, %v3382
    %v3442 = vpack.c.b16 %v3385, %v3384
    %v3443 = vpack.c.b16 %v3387, %v3386
    %v3444 = vpack.c.b16 %v3389, %v3388
    %v3445 = vpack.c.b16 %v3391, %v3390
    %v3446 = vpack.c.b16 %v3393, %v3392
    %v3447 = vpack.c.b16 %v3395, %v3394
    %v3448 = vpack.c.b16 %v3397, %v3396
    %v3449 = vpack.c.b16 %v3399, %v3398
    %v3450 = vpack.c.b16 %v3401, %v3400
    %v3451 = vpack.c.b16 %v3403, %v3402
    %v3452 = vpack.c.b16 %v3405, %v3404
    %v3453 = vpack.c.b16 %v3407, %v3406
    %v3454 = vpack.c.b16 %v3409, %v3408
    %v3455 = vpack.c.b16 %v3411, %v3410
    %v3456 = vpack.c.b16 %v3413, %v3412
    %v3457 = vpack.c.b16 %v3415, %v3414
    %v3458 = vpack.c.b16 %v3417, %v3416
    %v3459 = vpack.c.b16 %v3419, %v3418
    %3500 = vmatpush.bf16.msra.mxu0 %v3427
    %3501 = vmatpush.bf16.msra.mxu0 %v3426
    %3502 = vmatpush.bf16.msra.mxu0 %v3425
    %3503 = vmatpush.bf16.msra.mxu0 %v3424
    %3504 = vmatpush.bf16.msra.mxu0 %v3423
    %3505 = vmatpush.bf16.msra.mxu0 %v3422
    %3506 = vmatpush.bf16.msra.mxu0 %v3421
    %3507 = vmatpush.bf16.msra.mxu0 %v3420
    %3508 = vmatmul.bf16.gmra.mxu0 %v3171
    %v3509 = vpop.f32.mrf.mxu0
    %v3510 = vadd.f32 %v3258, %v3509
    %v3511 = vpop.f32.mrf.mxu0
    %3512 = vdwg.mxu0
    %3513 = vmatpush.bf16.msra.mxu0 %v3435
    %3514 = vmatpush.bf16.msra.mxu0 %v3434
    %3515 = vmatpush.bf16.msra.mxu0 %v3433
    %3516 = vmatpush.bf16.msra.mxu0 %v3432
    %3517 = vmatpush.bf16.msra.mxu0 %v3431
    %3518 = vmatpush.bf16.msra.mxu0 %v3430
    %3519 = vmatpush.bf16.msra.mxu0 %v3429
    %3520 = vmatpush.bf16.msra.mxu0 %v3428
    %3521 = vmatmul.bf16.gmra.mxu0 %v3172
    %v3522 = vpop.f32.mrf.mxu0
    %v3523 = vadd.f32 %v3510, %v3522
    %v3524 = vpop.f32.mrf.mxu0
    %3525 = vdwg.mxu0
    %3526 = vmatpush.bf16.msra.mxu0 %v3443
    %3527 = vmatpush.bf16.msra.mxu0 %v3442
    %3528 = vmatpush.bf16.msra.mxu0 %v3441
    %3529 = vmatpush.bf16.msra.mxu0 %v3440
    %3530 = vmatpush.bf16.msra.mxu0 %v3439
    %3531 = vmatpush.bf16.msra.mxu0 %v3438
    %3532 = vmatpush.bf16.msra.mxu0 %v3437
    %3533 = vmatpush.bf16.msra.mxu0 %v3436
    %3534 = vmatmul.bf16.gmra.mxu0 %v3173
    %v3535 = vpop.f32.mrf.mxu0
    %v3536 = vadd.f32 %v3523, %v3535
    %v3537 = vpop.f32.mrf.mxu0
    %3538 = vdwg.mxu0
    %3539 = vmatpush.bf16.msra.mxu0 %v3451
    %3540 = vmatpush.bf16.msra.mxu0 %v3450
    %3541 = vmatpush.bf16.msra.mxu0 %v3449
    %3542 = vmatpush.bf16.msra.mxu0 %v3448
    %3543 = vmatpush.bf16.msra.mxu0 %v3447
    %3544 = vmatpush.bf16.msra.mxu0 %v3446
    %3545 = vmatpush.bf16.msra.mxu0 %v3445
    %3546 = vmatpush.bf16.msra.mxu0 %v3444
    %3547 = vmatmul.bf16.gmra.mxu0 %v3174
    %v3548 = vpop.f32.mrf.mxu0
    %v3549 = vadd.f32 %v3536, %v3548
    %v3550 = vpop.f32.mrf.mxu0
    %3551 = vdwg.mxu0
    %3552 = vmatpush.bf16.msra.mxu0 %v3459
    %3553 = vmatpush.bf16.msra.mxu0 %v3458
    %3554 = vmatpush.bf16.msra.mxu0 %v3457
    %3555 = vmatpush.bf16.msra.mxu0 %v3456
    %3556 = vmatpush.bf16.msra.mxu0 %v3455
    %3557 = vmatpush.bf16.msra.mxu0 %v3454
    %3558 = vmatpush.bf16.msra.mxu0 %v3453
    %3559 = vmatpush.bf16.msra.mxu0 %v3452
    %3560 = vmatmul.bf16.gmra.mxu0 %v3175
    %v3561 = vpop.f32.mrf.mxu0
    %v3562 = vadd.f32 %v3549, %v3561
    %v3563 = vpop.f32.mrf.mxu0
    %3564 = vdwg.mxu0
    %v3565 = vlaneseq
    %v3566 = vand.u32 %v3565, 127
    %vm3567 = vcmp.lt.s32.totalorder %v3566, 10
    %v3568 = vsel %vm3567, %v3562, -1e+30
    %3569 = vmax.xlane.f32.xlu0 %v3568
    %v3570 = vpop.xlane.xlu0 %3569
    %v3571 = vsub.f32 %v3568, %v3570
    %v3572 = vmul.f32 %v3571, 1.442695
    %v3573 = vpow.pop %v3572
    %3574 = vadd.xlane.f32.xlu0 %v3573
    %v3575 = vpop.xlane.xlu0 %3574
    %v3576 = vlog2.pop %v3575
    %v3577 = vmul.f32 %v3576, 0.6931472
    %v3578 = vsub.f32 %v3571, %v3577
    %3579 = vst [vmem:[#allocation13] sm:$0xff] %v3578
    // Predicated region
    $region54: #{tpu_custom_call.1} parent=1 // pred_check
      _
    $region55: #{tpu_custom_call.1} parent=1 // pred_check_branch
      %3581 = sbr.rel (0) target = $region57
    $region56: #{tpu_custom_call.1} parent=1 // pred_region
      %3583 = vsyncadd [#allocation4], 0
      %s3585 = sshll.u32 [#allocation13], 4
      %s3586 = int_to_ptr.vmem [resolvable:$true] %s3585
      %s3587 = sshll.u32 %s7, 4
      %s3588 = int_to_ptr.hbm [resolvable:$true] %s3587
      %3590 = dma.vmem_to_hbm [thread:$0]  %s3586, 128, %s3588, [#allocation4]
    $region57: #{tpu_custom_call.1} parent=1 // pred_fallthru
      _
    // Predicated region
    $region58: #{tpu_custom_call.1} parent=1 // pred_check
      _
    $region59: #{tpu_custom_call.1} parent=1 // pred_check_branch
      %3592 = sbr.rel (0) target = $region61
    $region60: #{tpu_custom_call.1} parent=1 // pred_region
      %3594 = dma.done [#allocation4], 128
    $region61: #{tpu_custom_call.1} parent=1 // pred_fallthru
      _
    %3595 = vsyncpa [#allocation3], 1
    %3596 = vsyncpa [#allocation6], 1
    %3597 = vsyncpa [#allocation9], 1
    %3598 = vsyncpa [#allocation12], 1
    %3599 = vsyncpa [#allocation4], 1

</llo_original>
